<compile_context>
chip_gen: v5e
topology: v5e:2x2
jax: 0.10.0
libtpu: 0.0.40
codegen_flags: <defaults>
</compile_context>

<pallas_src>
import functools

import numpy as np
import jax
import jax.numpy as jnp
from jax.experimental import pallas as pl
from jax.experimental.pallas import tpu as pltpu  # noqa: F401  (TPU backend)

# ----------------------------------------------------------------------------
# Config (small, deterministic, consistent with the module's forward semantics)
# ----------------------------------------------------------------------------
INPUT_DIM = 32          # input_dim
EMBED_DIM = 8           # embedding_dim (per head)
NUM_HEADS = 4           # num_heads
N_TOTAL = 64            # scaled-down version of the 62071-row embedding table

HYPER_KEYS = [0, 2, 3, 4]   # hyperedge-type linear dict keys
NODE_KEYS = [0, 1]          # node-type linear dict keys
LN_EPS = 1e-5
NEG_BIG = -1.0e30           # finite masked bias: exact 0 after softmax, no NaN risk
SLAB_LANES = 128


# ----------------------------------------------------------------------------
# Host-side constant packing (one fp32 slab per attention block)
# ----------------------------------------------------------------------------
def _round_up(x, m):
    return ((x + m - 1) // m) * m


def _pack_slab(entries):
    """Pack named fp32 matrices row-wise into one [R, 128] slab (8-row aligned)."""
    meta, norm, off = {}, [], 0
    for name, arr in entries:
        a = np.asarray(arr, np.float32)
        if a.ndim == 1:
            a = a.reshape(1, -1)
        assert a.shape[1] <= SLAB_LANES, name
        meta[name] = (off, a.shape[0], a.shape[1])
        norm.append((name, a))
        off += _round_up(a.shape[0], 8)
    slab = np.zeros((_round_up(off, 8), SLAB_LANES), np.float32)
    for name, a in norm:
        o, r, c = meta[name]
        slab[o:o + r, :c] = a
    return jnp.asarray(slab), meta


def _type_selection_np(types_list, key_order, D):
    """sel[i, t*D+d] = 1 iff type(i) == key_order[t]."""
    T = len(key_order)
    m = np.zeros((len(types_list), T * D), np.float32)
    for i, t in enumerate(types_list):
        ti = key_order.index(int(t))
        m[i, ti * D:(ti + 1) * D] = 1.0
    return m


def _tile_matrix_np(D, T):
    """x @ tile replicates x T times along lanes."""
    m = np.zeros((D, T * D), np.float32)
    for t in range(T):
        m[np.arange(D), t * D + np.arange(D)] = 1.0
    return m


def _rep_rows_np(H, Nk):
    """rep @ k replicates k H times along rows -> [H*Nk, Nk]."""
    m = np.zeros((H * Nk, Nk), np.float32)
    for h in range(H):
        m[h * Nk + np.arange(Nk), np.arange(Nk)] = 1.0
    return m


def _stack_mask_np(H, Nk, E):
    """Row block h keeps only head h's lanes -> [H*Nk, H*E]."""
    m = np.zeros((H * Nk, H * E), np.float32)
    for h in range(H):
        m[h * Nk:(h + 1) * Nk, h * E:(h + 1) * E] = 1.0
    return m


def _head_block_mask_np(H, Nk):
    """Lane block of head h in the stacked score layout -> [H, H*Nk]."""
    m = np.zeros((H, H * Nk), np.float32)
    for h in range(H):
        m[h, h * Nk:(h + 1) * Nk] = 1.0
    return m


def _pack_block(p, *, q_types, kv_types, q_keys, kv_keys, ln_q, ln_kv, D, E, H):
    Tq, Tk = len(q_keys), len(kv_keys)
    Nk = len(kv_types)
    HE = H * E
    entries = [
        ('ln_qw', p[ln_q[0]]), ('ln_qb', p[ln_q[1]]),
        ('ln_kw', p[ln_kv[0]]), ('ln_kb', p[ln_kv[1]]),
        ('tile_q', _tile_matrix_np(D, Tq)),
        ('sel_q', _type_selection_np(q_types, q_keys, D)),
        ('qw', np.asarray(p['q_w']).reshape(Tq * D, HE)),
        ('tile_kv', _tile_matrix_np(D, Tk)),
        ('sel_kv', _type_selection_np(kv_types, kv_keys, D)),
        ('kw', np.asarray(p['k_w']).reshape(Tk * D, HE)),
        ('vw', np.asarray(p['v_w']).reshape(Tk * D, HE)),
        ('w_top', np.asarray(p['to_out_w'])[:D]),    # concat part 1: normed query
        ('w_bot', np.asarray(p['to_out_w'])[D:]),    # concat part 2: silu(attn out)
        ('ob', np.asarray(p['to_out_b']).reshape(1, D)),
        ('rep_rows', _rep_rows_np(H, Nk)),
        ('stack_mask', _stack_mask_np(H, Nk, E)),
        ('hblock', _head_block_mask_np(H, Nk)),
    ]
    return _pack_slab(entries)


def pack_meta_hgt(p, edge_types, node_types, D, E, H):
    slab_i, meta_i = _pack_block(
        p['intra'], q_types=edge_types, kv_types=node_types,
        q_keys=HYPER_KEYS, kv_keys=NODE_KEYS,
        ln_q=('norm_edge_w', 'norm_edge_b'), ln_kv=('norm_node_w', 'norm_node_b'),
        D=D, E=E, H=H)
    slab_x, meta_x = _pack_block(
        p['inter'], q_types=node_types, kv_types=edge_types,
        q_keys=NODE_KEYS, kv_keys=HYPER_KEYS,
        ln_q=('norm_node_w', 'norm_node_b'), ln_kv=('norm_edge_w', 'norm_edge_b'),
        D=D, E=E, H=H)
    return {'slab_intra': slab_i, 'meta_intra': meta_i,
            'slab_inter': slab_x, 'meta_inter': meta_x}


def prepare_packed(params, cfg, D, E, H):
    types = cfg['types']
    g_nt = [types[i] for i in cfg['integrated_gene_go_node_list']]
    g_et = [types[i] for i in cfg['integrated_gene_go_hyperedge_list']]
    d_nt = [types[i] for i in cfg['diseaseid_list']]
    d_et = [types[i] for i in cfg['hpo_do_gene_all_keys']]
    return {'gene': pack_meta_hgt(params['metaHGT_g'], g_et, g_nt, D, E, H),
            'disease': pack_meta_hgt(params['metaHGT_d'], d_et, d_nt, D, E, H)}


# ----------------------------------------------------------------------------
# Fused (IntraMA + InterMA) Pallas kernel — one launch per flow
# ----------------------------------------------------------------------------
def _read(slab_ref, meta, name):
    off, r, c = meta[name]
    return slab_ref[off:off + r, :c]


def _layer_norm(x, w, b):
    mu = jnp.mean(x, axis=-1, keepdims=True)
    var = jnp.mean((x - mu) ** 2, axis=-1, keepdims=True)
    return (x - mu) * jax.lax.rsqrt(var + LN_EPS) * w + b


def _attn_block(slab_ref, meta, q_feat, kv_feat, bias_all, num_heads, inv_scale):
    """One IntraMA/InterMA block. bias_all: [Nq, H*Nk] additive mask (0 / NEG_BIG)."""
    f32 = jnp.float32
    hq = _layer_norm(q_feat, _read(slab_ref, meta, 'ln_qw'), _read(slab_ref, meta, 'ln_qb'))
    hkv = _layer_norm(kv_feat, _read(slab_ref, meta, 'ln_kw'), _read(slab_ref, meta, 'ln_kb'))

    # typed Q/K/V projections as single K = T*D contractions:
    #   xe[i, t*D+d] = onehot(type_i == t) * x[i, d]
    q_exp = jnp.dot(hq, _read(slab_ref, meta, 'tile_q'),
                    preferred_element_type=f32) * _read(slab_ref, meta, 'sel_q')
    kv_exp = jnp.dot(hkv, _read(slab_ref, meta, 'tile_kv'),
                     preferred_element_type=f32) * _read(slab_ref, meta, 'sel_kv')
    q = jnp.dot(q_exp, _read(slab_ref, meta, 'qw'), preferred_element_type=f32) * inv_scale
    k = jnp.dot(kv_exp, _read(slab_ref, meta, 'kw'), preferred_element_type=f32)
    v = jnp.dot(kv_exp, _read(slab_ref, meta, 'vw'), preferred_element_type=f32)

    # head-stacked K / V ([H*Nk, HE]): row block h keeps only head h's lanes
    rep = _read(slab_ref, meta, 'rep_rows')
    smask = _read(slab_ref, meta, 'stack_mask')
    k_stack = jnp.dot(rep, k, preferred_element_type=f32) * smask
    v_stack = jnp.dot(rep, v, preferred_element_type=f32) * smask

    # all-head scores in ONE lane-dense matmul: [Nq, H*Nk]
    s = jax.lax.dot_general(q, k_stack, (((1,), (1,)), ((), ())),
                            preferred_element_type=f32)
    s = s + bias_all
    scores_out = jnp.where(bias_all < 0.0, -jnp.inf, s)   # reference -inf semantics

    # per-head-block softmax along lanes (4 cheap masked lane reductions, XLU slot)
    # NOTE: an all-masked query row (disallowed by the caller, like the PyTorch
    # reference) falls back to uniform weights instead of NaN thanks to NEG_BIG.
    hblock = _read(slab_ref, meta, 'hblock')               # [H, H*Nk]
    m = jnp.zeros_like(s)
    for h in range(num_heads):                              # H=4, statically unrolled
        row = hblock[h:h + 1, :]
        mh = jnp.max(jnp.where(row > 0.0, s, -jnp.inf), axis=-1, keepdims=True)
        m = m + mh * row
    p = jnp.exp(s - m)
    linv = jnp.zeros_like(s)
    for h in range(num_heads):
        row = hblock[h:h + 1, :]
        lh = jnp.sum(p * row, axis=-1, keepdims=True)
        linv = linv + pl.reciprocal(lh, approx=True) * row
    w = p * linv
    # TODO(synk): nn.Dropout on the attention weights is identity (eval mode).

    out = jnp.dot(w, v_stack, preferred_element_type=f32)   # all-head PV, ONE matmul

    # SiLU + to_out(concat([normed_query, silu(out)]))
    act = out * pl.reciprocal(1.0 + jnp.exp(-out), approx=True)
    final = (jnp.dot(hq, _read(slab_ref, meta, 'w_top'), preferred_element_type=f32)
             + jnp.dot(act, _read(slab_ref, meta, 'w_bot'), preferred_element_type=f32)
             + _read(slab_ref, meta, 'ob'))
    return final, scores_out


def _meta_hgt_kernel(edge_ref, node_ref, bias_i_ref, bias_x_ref, slab_i_ref, slab_x_ref,
                     upd_e_ref, upd_n_ref, s_i_ref, s_x_ref,
                     *, meta_i, meta_x, num_heads, inv_scale):
    f32 = jnp.float32
    edge_feat = edge_ref[...].astype(f32)
    node_feat = node_ref[...].astype(f32)

    # IntraMA: queries = hyperedges, keys/values = nodes
    upd_edges, s_intra = _attn_block(slab_i_ref, meta_i, edge_feat, node_feat,
                                     bias_i_ref[...], num_heads, inv_scale)
    upd_e_ref[...] = upd_edges.astype(upd_e_ref.dtype)
    s_i_ref[...] = s_intra

    # InterMA: queries = nodes, keys/values = the Intra output (stays on-chip)
    upd_nodes, s_inter = _attn_block(slab_x_ref, meta_x, node_feat, upd_edges,
                                     bias_x_ref[...], num_heads, inv_scale)
    upd_n_ref[...] = upd_nodes.astype(upd_n_ref.dtype)
    s_x_ref[...] = s_inter


def _flow_cost(Ne, Nn, D, E, H):
    HE = H * E

    def block(Nq, Nk, Tq, Tk):
        mm = (Nq * D * Tq * D + Nk * D * Tk * D
              + Nq * Tq * D * HE + 2 * Nk * Tk * D * HE
              + 2 * H * Nk * Nk * HE
              + Nq * HE * H * Nk + Nq * H * Nk * HE
              + Nq * D * D + Nq * HE * D)
        trans = Nq * H * Nk + Nq * HE + Nq * H
        return 2 * mm, trans

    f1, t1 = block(Ne, Nn, len(HYPER_KEYS), len(NODE_KEYS))
    f2, t2 = block(Nn, Ne, len(NODE_KEYS), len(HYPER_KEYS))
    return int(f1 + f2), int(t1 + t2)


def meta_hgt_fused(packed, edge_feat, node_feat, incidence, H, E):
    """Fused MetaHGT layer (IntraMA + InterMA) in one pallas_call."""
    Ne, D = edge_feat.shape
    Nn = node_feat.shape[0]

    # additive masks, pre-tiled across heads along lanes (hoisted out of the kernel)
    bias_intra = jnp.where(incidence.T == 0, jnp.float32(NEG_BIG), jnp.float32(0.0))
    bias_inter = jnp.where(incidence == 0, jnp.float32(NEG_BIG), jnp.float32(0.0))
    bias_intra_all = jnp.tile(bias_intra, (1, H))     # [Ne, H*Nn]
    bias_inter_all = jnp.tile(bias_inter, (1, H))     # [Nn, H*Ne]

    kernel = functools.partial(
        _meta_hgt_kernel, meta_i=packed['meta_intra'], meta_x=packed['meta_inter'],
        num_heads=H, inv_scale=1.0 / float(E) ** 0.5)

    flops, trans = _flow_cost(Ne, Nn, D, E, H)
    bytes_accessed = 4 * int(edge_feat.size + node_feat.size
                             + bias_intra_all.size + bias_inter_all.size
                             + packed['slab_intra'].size + packed['slab_inter'].size
                             + Ne * D + Nn * D + Ne * H * Nn + Nn * H * Ne)

    # TODO(synk): at the 62071-row production size add row tiling (grid + BlockSpec)
    # with per-generation tile budgets (v7x 64 MiB VMEM, v5e 16 MiB scoped default)
    # and bf16 MXU inputs on v6e/v7x; untiled is optimal at these toy shapes.
    upd_edges, upd_nodes, s_i_flat, s_x_flat = pl.pallas_call(
        kernel,
        out_shape=(jax.ShapeDtypeStruct((Ne, D), edge_feat.dtype),
                   jax.ShapeDtypeStruct((Nn, D), node_feat.dtype),
                   jax.ShapeDtypeStruct((Ne, H * Nn), jnp.float32),
                   jax.ShapeDtypeStruct((Nn, H * Ne), jnp.float32)),
        cost_estimate=pl.CostEstimate(flops=flops, transcendentals=trans,
                                      bytes_accessed=bytes_accessed),
    )(edge_feat, node_feat, bias_intra_all, bias_inter_all,
      packed['slab_intra'], packed['slab_inter'])

    # lane-dense [Nq, H*Nk] -> reference layout [H, Nq, Nk]
    s_intra = s_i_flat.reshape(Ne, H, Nn).transpose(1, 0, 2)
    s_inter = s_x_flat.reshape(Nn, H, Ne).transpose(1, 0, 2)
    return upd_edges, upd_nodes, {'Intra': s_intra, 'Inter': s_inter}


# ----------------------------------------------------------------------------
# Plain-JAX glue: semantic attention, embedding gathers/scatters
# ----------------------------------------------------------------------------
def semantic_attention(node, edge, node_idx, edge_idx, n_all_genes, weight):
    D = node.shape[-1]
    emb1 = jnp.zeros((n_all_genes, D), node.dtype).at[jnp.array(node_idx)].set(node)
    emb2 = jnp.zeros((n_all_genes, D), edge.dtype).at[jnp.array(edge_idx)].set(edge)
    repr_go = jnp.mean(emb1, axis=0)
    repr_gene = jnp.mean(emb2, axis=0)
    rep = jnp.stack([repr_go, repr_gene], axis=1)      # [D, 2]
    scores = weight @ rep                              # [2]
    attn = jax.nn.softmax(scores)
    out = attn[0] * emb1 + attn[1] * emb2
    return out, scores


def hit_forward(params, cfg, packed, gene_total_incidence_matrix, disease_integrated_incidence):
    E, H = EMBED_DIM, NUM_HEADS
    emb = params['embedding']                                  # [N_TOTAL, D]

    # ---------------- gene flow ----------------
    node_idx = cfg['integrated_gene_go_node_list']
    edge_idx = cfg['integrated_gene_go_hyperedge_list']
    genes_in_edges = cfg['genes_in_integrated_gene_go_hyperedge_list']
    all_genes = cfg['all_genes']

    # TODO(synk): embedding gathers / .at[].set scatters stay as XLA glue; at the
    # 62071-row production size these should become in-kernel DMA gathers/scatters
    # (scalar-prefetch index lists) or at least alias the table (input_output_aliases).
    gene_node_feat = emb[jnp.array(node_idx)]
    gene_edge_feat = emb[jnp.array(edge_idx)]
    initial_gene_embedding = emb[jnp.array(all_genes)]

    upd_edges, upd_nodes, scores_gene = meta_hgt_fused(
        packed['gene'], gene_edge_feat, gene_node_feat, gene_total_incidence_matrix, H, E)

    emb = emb.at[jnp.array(edge_idx)].set(upd_edges)
    gene_hyper_emb = emb[jnp.array(genes_in_edges)]
    sem_out, sem_score = semantic_attention(
        upd_nodes, gene_hyper_emb, node_idx, genes_in_edges,
        len(all_genes), params['semantic_weight'])
    scores_gene['semantic'] = sem_score
    gene_expression = sem_out + initial_gene_embedding

    # ---------------- disease flow ----------------
    emb = emb.at[jnp.array(all_genes)].set(gene_expression)
    d_node_idx = cfg['diseaseid_list']
    d_edge_idx = cfg['hpo_do_gene_all_keys']
    d_node_feat = emb[jnp.array(d_node_idx)]
    d_edge_feat = emb[jnp.array(d_edge_idx)]
    initial_disease_embedding = emb[jnp.array(d_node_idx)]

    d_upd_edges, d_upd_nodes, scores_disease = meta_hgt_fused(
        packed['disease'], d_edge_feat, d_node_feat, disease_integrated_incidence, H, E)
    disease_expression = d_upd_nodes + initial_disease_embedding

    emb = emb.at[jnp.array(d_edge_idx)].set(d_upd_edges)
    emb = emb.at[jnp.array(d_node_idx)].set(disease_expression)

    return emb, {'gene': scores_gene, 'disease': scores_disease}


# ----------------------------------------------------------------------------
# Pure-JAX reference (for a correctness smoke test of the fused kernel)
# ----------------------------------------------------------------------------
def _reference_block(p, q_feat, kv_feat, mask, q_types, kv_types, q_keys, kv_keys,
                     ln_q_w, ln_q_b, ln_kv_w, ln_kv_b, H, E):
    def ln(x, w, b):
        mu = x.mean(-1, keepdims=True)
        var = ((x - mu) ** 2).mean(-1, keepdims=True)
        return (x - mu) / jnp.sqrt(var + LN_EPS) * w + b

    hq = ln(q_feat, ln_q_w, ln_q_b)
    hkv = ln(kv_feat, ln_kv_w, ln_kv_b)
    qsel = np.array([q_keys.index(int(t)) for t in q_types])
    ksel = np.array([kv_keys.index(int(t)) for t in kv_types])
    q = jnp.einsum('nd,nde->ne', hq, p['q_w'][qsel])
    k = jnp.einsum('nd,nde->ne', hkv, p['k_w'][ksel])
    v = jnp.einsum('nd,nde->ne', hkv, p['v_w'][ksel])
    qh = q.reshape(-1, H, E).transpose(1, 0, 2)
    kh = k.reshape(-1, H, E).transpose(1, 0, 2)
    vh = v.reshape(-1, H, E).transpose(1, 0, 2)
    s = jnp.einsum('hid,hjd->hij', qh, kh) / (E ** 0.5)
    s = jnp.where(mask[None] == 0, -jnp.inf, s)
    w = jax.nn.softmax(s, axis=-1)
    o = jnp.einsum('hij,hjd->hid', w, vh).transpose(1, 0, 2).reshape(-1, H * E)
    o = o * jax.nn.sigmoid(o)
    final = jnp.concatenate([hq, o], axis=-1) @ p['to_out_w'] + p['to_out_b']
    return final, s


def _reference_meta_hgt(p, edge_feat, node_feat, incidence, node_types, edge_types, H, E):
    upd_e, _ = _reference_block(
        p['intra'], edge_feat, node_feat, incidence.T, edge_types, node_types,
        HYPER_KEYS, NODE_KEYS,
        p['intra']['norm_edge_w'], p['intra']['norm_edge_b'],
        p['intra']['norm_node_w'], p['intra']['norm_node_b'], H, E)
    upd_n, _ = _reference_block(
        p['inter'], node_feat, upd_e, incidence, node_types, edge_types,
        NODE_KEYS, HYPER_KEYS,
        p['inter']['norm_node_w'], p['inter']['norm_node_b'],
        p['inter']['norm_edge_w'], p['inter']['norm_edge_b'], H, E)
    return upd_e, upd_n


# ----------------------------------------------------------------------------
# Parameter init (deterministic, synthetic)
# ----------------------------------------------------------------------------
def init_attention_params(key, D, E, H, q_keys, kv_keys):
    HE = E * H
    ks = jax.random.split(key, 5)
    std = 0.05
    return {
        'q_w': (jax.random.normal(ks[0], (len(q_keys), D, HE)) * std).astype(jnp.float32),
        'k_w': (jax.random.normal(ks[1], (len(kv_keys), D, HE)) * std).astype(jnp.float32),
        'v_w': (jax.random.normal(ks[2], (len(kv_keys), D, HE)) * std).astype(jnp.float32),
        'to_out_w': (jax.random.normal(ks[3], (D + HE, D)) * std).astype(jnp.float32),
        'to_out_b': (jax.random.normal(ks[4], (D,)) * std).astype(jnp.float32),
        'norm_edge_w': jnp.ones((D,), jnp.float32),
        'norm_edge_b': jnp.zeros((D,), jnp.float32),
        'norm_node_w': jnp.ones((D,), jnp.float32),
        'norm_node_b': jnp.zeros((D,), jnp.float32),
    }


def init_meta_hgt(key, D, E, H):
    k1, k2 = jax.random.split(key)
    return {
        'intra': init_attention_params(k1, D, E, H, HYPER_KEYS, NODE_KEYS),
        'inter': init_attention_params(k2, D, E, H, NODE_KEYS, HYPER_KEYS),
    }


def build_types(n_total):
    types = []
    for i in range(n_total):
        if i <= 15:
            types.append(0)   # genes
        elif i <= 27:
            types.append(2)   # GO terms
        elif i <= 39:
            types.append(1)   # diseases
        elif i <= 51:
            types.append(3)   # HPO
        else:
            types.append(4)   # DO
    return types


# ----------------------------------------------------------------------------
# Main
# ----------------------------------------------------------------------------
if __name__ == "__main__":
    key = jax.random.PRNGKey(0)
    k_emb, k_g, k_d, k_sem, k_inc1, k_inc2 = jax.random.split(key, 6)

    all_genes = list(range(0, 16))                              # type 0
    integrated_gene_go_node_list = list(range(0, 12))           # gene nodes (type 0)
    integrated_gene_go_hyperedge_list = list(range(16, 26)) + [12, 13]  # GO(2)+genes(0)
    genes_in_edges = sorted(set(all_genes) & set(integrated_gene_go_hyperedge_list))
    diseaseid_list = list(range(28, 40))                        # type 1
    hpo_do_gene_all_keys = list(range(40, 48)) + list(range(52, 58)) + [0, 1]  # 3,4,0

    cfg = {
        'types': build_types(N_TOTAL),
        'all_genes': all_genes,
        'integrated_gene_go_node_list': integrated_gene_go_node_list,
        'integrated_gene_go_hyperedge_list': integrated_gene_go_hyperedge_list,
        'genes_in_integrated_gene_go_hyperedge_list': genes_in_edges,
        'diseaseid_list': diseaseid_list,
        'hpo_do_gene_all_keys': hpo_do_gene_all_keys,
    }

    params = {
        'embedding': jax.random.normal(k_emb, (N_TOTAL, INPUT_DIM)).astype(jnp.float32),
        'metaHGT_g': init_meta_hgt(k_g, INPUT_DIM, EMBED_DIM, NUM_HEADS),
        'metaHGT_d': init_meta_hgt(k_d, INPUT_DIM, EMBED_DIM, NUM_HEADS),
        'semantic_weight': (jax.random.normal(k_sem, (INPUT_DIM,)) * 0.01).astype(jnp.float32),
    }

    # Pre-pack the per-block constant slabs once (host-side, outside jit).
    packed = prepare_packed(params, cfg, INPUT_DIM, EMBED_DIM, NUM_HEADS)

    # Incidence matrices: [num_nodes, num_hyperedges]; every node row and
    # hyperedge column connected at least once (softmax never sees a fully
    # masked row, matching the PyTorch module's implicit assumption).
    def make_incidence(k, nn, ne):
        inc = np.array(jax.random.bernoulli(k, 0.4, (nn, ne)), dtype=np.float32)
        for j in range(ne):
            inc[j % nn, j] = 1.0
        for i in range(nn):
            inc[i, i % ne] = 1.0
        return jnp.array(inc)

    gene_inc = make_incidence(k_inc1, len(integrated_gene_go_node_list),
                              len(integrated_gene_go_hyperedge_list))      # [12, 12]
    disease_inc = make_incidence(k_inc2, len(diseaseid_list),
                                 len(hpo_do_gene_all_keys))                # [12, 16]

    # --- correctness smoke test: fused Pallas kernel vs pure-JAX reference ---
    types = cfg['types']
    g_node_types = [types[i] for i in integrated_gene_go_node_list]
    g_edge_types = [types[i] for i in integrated_gene_go_hyperedge_list]
    e_feat = params['embedding'][jnp.array(integrated_gene_go_hyperedge_list)]
    n_feat = params['embedding'][jnp.array(integrated_gene_go_node_list)]
    k_e, k_n, _ = meta_hgt_fused(packed['gene'], e_feat, n_feat, gene_inc,
                                 NUM_HEADS, EMBED_DIM)
    r_e, r_n = _reference_meta_hgt(params['metaHGT_g'], e_feat, n_feat, gene_inc,
                                   g_node_types, g_edge_types, NUM_HEADS, EMBED_DIM)
    assert bool(jnp.allclose(k_e, r_e, atol=1e-2, rtol=1e-2))
    assert bool(jnp.allclose(k_n, r_n, atol=1e-2, rtol=1e-2))

    # --- full HIT forward (2 fused Pallas launches + XLA glue) ---
    fwd = jax.jit(lambda gi, di: hit_forward(params, cfg, packed, gi, di))
    embedding_matrix, scores_attention = fwd(gene_inc, disease_inc)
    jax.block_until_ready((embedding_matrix, scores_attention))

    assert embedding_matrix.shape == (N_TOTAL, INPUT_DIM)
    assert bool(jnp.all(jnp.isfinite(embedding_matrix)))
    assert scores_attention['gene']['Intra'].shape == (NUM_HEADS, 12, 12)
    assert scores_attention['disease']['Inter'].shape == (NUM_HEADS, 12, 16)
    print("KERNEL_OK")
</pallas_src>

<mosaic_0001>
module attributes {stable_mosaic.version = 11 : i64} {
  func.func @_meta_hgt_kernel(%arg0: memref<12x32xf32, #tpu.memory_space<vmem>>, %arg1: memref<12x32xf32, #tpu.memory_space<vmem>>, %arg2: memref<12x48xf32, #tpu.memory_space<vmem>>, %arg3: memref<12x48xf32, #tpu.memory_space<vmem>>, %arg4: memref<560x128xf32, #tpu.memory_space<vmem>>, %arg5: memref<624x128xf32, #tpu.memory_space<vmem>>, %arg6: memref<12x32xf32, #tpu.memory_space<vmem>>, %arg7: memref<12x32xf32, #tpu.memory_space<vmem>>, %arg8: memref<12x48xf32, #tpu.memory_space<vmem>>, %arg9: memref<12x48xf32, #tpu.memory_space<vmem>>) attributes {dimension_semantics = [], scalar_prefetch = 0 : i64, scratch_operands = 0 : i64, tpu.core_type = #tpu.core_type<tc>} {
    %c0 = arith.constant 0 : index
    %c0_0 = arith.constant 0 : index
    %0 = vector.load %arg0[%c0, %c0_0] : memref<12x32xf32, #tpu.memory_space<vmem>>, vector<12x32xf32>
    %c0_1 = arith.constant 0 : index
    %c0_2 = arith.constant 0 : index
    %1 = vector.load %arg1[%c0_1, %c0_2] : memref<12x32xf32, #tpu.memory_space<vmem>>, vector<12x32xf32>
    %c0_3 = arith.constant 0 : index
    %c0_4 = arith.constant 0 : index
    %2 = vector.load %arg2[%c0_3, %c0_4] : memref<12x48xf32, #tpu.memory_space<vmem>>, vector<12x48xf32>
    %c0_5 = arith.constant 0 : index
    %c0_6 = arith.constant 0 : index
    %3 = vector.load %arg4[%c0_5, %c0_6] : memref<560x128xf32, #tpu.memory_space<vmem>>, vector<1x32xf32>
    %c8 = arith.constant 8 : index
    %c0_7 = arith.constant 0 : index
    %4 = vector.load %arg4[%c8, %c0_7] : memref<560x128xf32, #tpu.memory_space<vmem>>, vector<1x32xf32>
    %cst = arith.constant dense<0.000000e+00> : vector<12xf32>
    %5 = vector.multi_reduction <add>, %0, %cst [1] : vector<12x32xf32> to vector<12xf32>
    %6 = vector.shape_cast %5 : vector<12xf32> to vector<12x1xf32>
    %cst_8 = arith.constant 3.200000e+01 : f32
    %7 = vector.broadcast %cst_8 : f32 to vector<12x1xf32>
    %8 = arith.divf %6, %7 : vector<12x1xf32>
    %9 = vector.broadcast %8 : vector<12x1xf32> to vector<12x32xf32>
    %10 = arith.subf %0, %9 : vector<12x32xf32>
    %11 = arith.mulf %10, %10 : vector<12x32xf32>
    %cst_9 = arith.constant dense<0.000000e+00> : vector<12xf32>
    %12 = vector.multi_reduction <add>, %11, %cst_9 [1] : vector<12x32xf32> to vector<12xf32>
    %13 = vector.shape_cast %12 : vector<12xf32> to vector<12x1xf32>
    %cst_10 = arith.constant 3.200000e+01 : f32
    %14 = vector.broadcast %cst_10 : f32 to vector<12x1xf32>
    %15 = arith.divf %13, %14 : vector<12x1xf32>
    %16 = vector.broadcast %8 : vector<12x1xf32> to vector<12x32xf32>
    %17 = arith.subf %0, %16 : vector<12x32xf32>
    %cst_11 = arith.constant 9.99999974E-6 : f32
    %18 = vector.broadcast %cst_11 : f32 to vector<12x1xf32>
    %19 = arith.addf %15, %18 : vector<12x1xf32>
    %20 = math.rsqrt %19 : vector<12x1xf32>
    %21 = vector.broadcast %20 : vector<12x1xf32> to vector<12x32xf32>
    %22 = arith.mulf %17, %21 : vector<12x32xf32>
    %23 = vector.broadcast %3 : vector<1x32xf32> to vector<12x32xf32>
    %24 = arith.mulf %22, %23 : vector<12x32xf32>
    %25 = vector.broadcast %4 : vector<1x32xf32> to vector<12x32xf32>
    %26 = arith.addf %24, %25 : vector<12x32xf32>
    %c16 = arith.constant 16 : index
    %c0_12 = arith.constant 0 : index
    %27 = vector.load %arg4[%c16, %c0_12] : memref<560x128xf32, #tpu.memory_space<vmem>>, vector<1x32xf32>
    %c24 = arith.constant 24 : index
    %c0_13 = arith.constant 0 : index
    %28 = vector.load %arg4[%c24, %c0_13] : memref<560x128xf32, #tpu.memory_space<vmem>>, vector<1x32xf32>
    %cst_14 = arith.constant dense<0.000000e+00> : vector<12xf32>
    %29 = vector.multi_reduction <add>, %1, %cst_14 [1] : vector<12x32xf32> to vector<12xf32>
    %30 = vector.shape_cast %29 : vector<12xf32> to vector<12x1xf32>
    %cst_15 = arith.constant 3.200000e+01 : f32
    %31 = vector.broadcast %cst_15 : f32 to vector<12x1xf32>
    %32 = arith.divf %30, %31 : vector<12x1xf32>
    %33 = vector.broadcast %32 : vector<12x1xf32> to vector<12x32xf32>
    %34 = arith.subf %1, %33 : vector<12x32xf32>
    %35 = arith.mulf %34, %34 : vector<12x32xf32>
    %cst_16 = arith.constant dense<0.000000e+00> : vector<12xf32>
    %36 = vector.multi_reduction <add>, %35, %cst_16 [1] : vector<12x32xf32> to vector<12xf32>
    %37 = vector.shape_cast %36 : vector<12xf32> to vector<12x1xf32>
    %cst_17 = arith.constant 3.200000e+01 : f32
    %38 = vector.broadcast %cst_17 : f32 to vector<12x1xf32>
    %39 = arith.divf %37, %38 : vector<12x1xf32>
    %40 = vector.broadcast %32 : vector<12x1xf32> to vector<12x32xf32>
    %41 = arith.subf %1, %40 : vector<12x32xf32>
    %cst_18 = arith.constant 9.99999974E-6 : f32
    %42 = vector.broadcast %cst_18 : f32 to vector<12x1xf32>
    %43 = arith.addf %39, %42 : vector<12x1xf32>
    %44 = math.rsqrt %43 : vector<12x1xf32>
    %45 = vector.broadcast %44 : vector<12x1xf32> to vector<12x32xf32>
    %46 = arith.mulf %41, %45 : vector<12x32xf32>
    %47 = vector.broadcast %27 : vector<1x32xf32> to vector<12x32xf32>
    %48 = arith.mulf %46, %47 : vector<12x32xf32>
    %49 = vector.broadcast %28 : vector<1x32xf32> to vector<12x32xf32>
    %50 = arith.addf %48, %49 : vector<12x32xf32>
    %c32 = arith.constant 32 : index
    %c0_19 = arith.constant 0 : index
    %51 = vector.load %arg4[%c32, %c0_19] : memref<560x128xf32, #tpu.memory_space<vmem>>, vector<32x128xf32>
    %cst_20 = arith.constant dense<0.000000e+00> : vector<12x128xf32>
    %52 = tpu.matmul %26, %51, %cst_20 {dimension_numbers = #tpu.dot_dimension_numbers<[1], [0], [0], [1], [0, 0, 1, 1], [], []>} : vector<12x32xf32>, vector<32x128xf32>, vector<12x128xf32> -> vector<12x128xf32>
    %c64 = arith.constant 64 : index
    %c0_21 = arith.constant 0 : index
    %53 = vector.load %arg4[%c64, %c0_21] : memref<560x128xf32, #tpu.memory_space<vmem>>, vector<12x128xf32>
    %54 = arith.mulf %52, %53 : vector<12x128xf32>
    %c208 = arith.constant 208 : index
    %c0_22 = arith.constant 0 : index
    %55 = vector.load %arg4[%c208, %c0_22] : memref<560x128xf32, #tpu.memory_space<vmem>>, vector<32x64xf32>
    %cst_23 = arith.constant dense<0.000000e+00> : vector<12x64xf32>
    %56 = tpu.matmul %50, %55, %cst_23 {dimension_numbers = #tpu.dot_dimension_numbers<[1], [0], [0], [1], [0, 0, 1, 1], [], []>} : vector<12x32xf32>, vector<32x64xf32>, vector<12x64xf32> -> vector<12x64xf32>
    %c240 = arith.constant 240 : index
    %c0_24 = arith.constant 0 : index
    %57 = vector.load %arg4[%c240, %c0_24] : memref<560x128xf32, #tpu.memory_space<vmem>>, vector<12x64xf32>
    %58 = arith.mulf %56, %57 : vector<12x64xf32>
    %c80 = arith.constant 80 : index
    %c0_25 = arith.constant 0 : index
    %59 = vector.load %arg4[%c80, %c0_25] : memref<560x128xf32, #tpu.memory_space<vmem>>, vector<128x32xf32>
    %cst_26 = arith.constant dense<0.000000e+00> : vector<12x32xf32>
    %60 = tpu.matmul %54, %59, %cst_26 {dimension_numbers = #tpu.dot_dimension_numbers<[1], [0], [0], [1], [0, 0, 1, 1], [], []>} : vector<12x128xf32>, vector<128x32xf32>, vector<12x32xf32> -> vector<12x32xf32>
    %cst_27 = arith.constant 0.353553385 : f32
    %61 = vector.broadcast %cst_27 : f32 to vector<12x32xf32>
    %62 = arith.mulf %60, %61 : vector<12x32xf32>
    %c256 = arith.constant 256 : index
    %c0_28 = arith.constant 0 : index
    %63 = vector.load %arg4[%c256, %c0_28] : memref<560x128xf32, #tpu.memory_space<vmem>>, vector<64x32xf32>
    %cst_29 = arith.constant dense<0.000000e+00> : vector<12x32xf32>
    %64 = tpu.matmul %58, %63, %cst_29 {dimension_numbers = #tpu.dot_dimension_numbers<[1], [0], [0], [1], [0, 0, 1, 1], [], []>} : vector<12x64xf32>, vector<64x32xf32>, vector<12x32xf32> -> vector<12x32xf32>
    %c320 = arith.constant 320 : index
    %c0_30 = arith.constant 0 : index
    %65 = vector.load %arg4[%c320, %c0_30] : memref<560x128xf32, #tpu.memory_space<vmem>>, vector<64x32xf32>
    %cst_31 = arith.constant dense<0.000000e+00> : vector<12x32xf32>
    %66 = tpu.matmul %58, %65, %cst_31 {dimension_numbers = #tpu.dot_dimension_numbers<[1], [0], [0], [1], [0, 0, 1, 1], [], []>} : vector<12x64xf32>, vector<64x32xf32>, vector<12x32xf32> -> vector<12x32xf32>
    %c456 = arith.constant 456 : index
    %c0_32 = arith.constant 0 : index
    %67 = vector.load %arg4[%c456, %c0_32] : memref<560x128xf32, #tpu.memory_space<vmem>>, vector<48x12xf32>
    %c504 = arith.constant 504 : index
    %c0_33 = arith.constant 0 : index
    %68 = vector.load %arg4[%c504, %c0_33] : memref<560x128xf32, #tpu.memory_space<vmem>>, vector<48x32xf32>
    %cst_34 = arith.constant dense<0.000000e+00> : vector<48x32xf32>
    %69 = tpu.matmul %67, %64, %cst_34 {dimension_numbers = #tpu.dot_dimension_numbers<[1], [0], [0], [1], [0, 0, 1, 1], [], []>} : vector<48x12xf32>, vector<12x32xf32>, vector<48x32xf32> -> vector<48x32xf32>
    %70 = arith.mulf %69, %68 : vector<48x32xf32>
    %cst_35 = arith.constant dense<0.000000e+00> : vector<48x32xf32>
    %71 = tpu.matmul %67, %66, %cst_35 {dimension_numbers = #tpu.dot_dimension_numbers<[1], [0], [0], [1], [0, 0, 1, 1], [], []>} : vector<48x12xf32>, vector<12x32xf32>, vector<48x32xf32> -> vector<48x32xf32>
    %72 = arith.mulf %71, %68 : vector<48x32xf32>
    %cst_36 = arith.constant dense<0.000000e+00> : vector<12x48xf32>
    %73 = tpu.matmul %62, %70, %cst_36 {dimension_numbers = #tpu.dot_dimension_numbers<[1], [1], [0], [0], [0, 0, 1, 0], [], []>} : vector<12x32xf32>, vector<48x32xf32>, vector<12x48xf32> -> vector<12x48xf32>
    %74 = arith.addf %73, %2 : vector<12x48xf32>
    %cst_37 = arith.constant 0.000000e+00 : f32
    %75 = vector.broadcast %cst_37 : f32 to vector<12x48xf32>
    %76 = arith.cmpf olt, %2, %75 : vector<12x48xf32>
    %cst_38 = arith.constant 0xFF800000 : f32
    %77 = vector.broadcast %cst_38 : f32 to vector<12x48xf32>
    %78 = arith.select %76, %77, %74 : vector<12x48xi1>, vector<12x48xf32>
    %c552 = arith.constant 552 : index
    %c0_39 = arith.constant 0 : index
    %79 = vector.load %arg4[%c552, %c0_39] : memref<560x128xf32, #tpu.memory_space<vmem>>, vector<4x48xf32>
    %cst_40 = arith.constant 0.000000e+00 : f32
    %80 = vector.broadcast %cst_40 : f32 to vector<12x48xf32>
    %81 = vector.extract_strided_slice %79 {offsets = [0, 0], sizes = [1, 48], strides = [1, 1]} : vector<4x48xf32> to vector<1x48xf32>
    %cst_41 = arith.constant 0.000000e+00 : f32
    %82 = vector.broadcast %cst_41 : f32 to vector<1x48xf32>
    %83 = arith.cmpf ogt, %81, %82 : vector<1x48xf32>
    %cst_42 = arith.constant 0xFF800000 : f32
    %84 = vector.shape_cast %83 : vector<1x48xi1> to vector<1x48xi1>
    %85 = vector.broadcast %84 : vector<1x48xi1> to vector<12x48xi1>
    %86 = vector.broadcast %cst_42 : f32 to vector<12x48xf32>
    %87 = arith.select %85, %74, %86 : vector<12x48xi1>, vector<12x48xf32>
    %cst_43 = arith.constant dense<0xFF800000> : vector<12xf32>
    %88 = vector.multi_reduction <maximumf>, %87, %cst_43 [1] : vector<12x48xf32> to vector<12xf32>
    %89 = vector.shape_cast %88 : vector<12xf32> to vector<12x1xf32>
    %90 = vector.broadcast %89 : vector<12x1xf32> to vector<12x48xf32>
    %91 = vector.broadcast %81 : vector<1x48xf32> to vector<12x48xf32>
    %92 = arith.mulf %90, %91 : vector<12x48xf32>
    %93 = arith.addf %80, %92 : vector<12x48xf32>
    %94 = vector.extract_strided_slice %79 {offsets = [1, 0], sizes = [1, 48], strides = [1, 1]} : vector<4x48xf32> to vector<1x48xf32>
    %cst_44 = arith.constant 0.000000e+00 : f32
    %95 = vector.broadcast %cst_44 : f32 to vector<1x48xf32>
    %96 = arith.cmpf ogt, %94, %95 : vector<1x48xf32>
    %cst_45 = arith.constant 0xFF800000 : f32
    %97 = vector.shape_cast %96 : vector<1x48xi1> to vector<1x48xi1>
    %98 = vector.broadcast %97 : vector<1x48xi1> to vector<12x48xi1>
    %99 = vector.broadcast %cst_45 : f32 to vector<12x48xf32>
    %100 = arith.select %98, %74, %99 : vector<12x48xi1>, vector<12x48xf32>
    %cst_46 = arith.constant dense<0xFF800000> : vector<12xf32>
    %101 = vector.multi_reduction <maximumf>, %100, %cst_46 [1] : vector<12x48xf32> to vector<12xf32>
    %102 = vector.shape_cast %101 : vector<12xf32> to vector<12x1xf32>
    %103 = vector.broadcast %102 : vector<12x1xf32> to vector<12x48xf32>
    %104 = vector.broadcast %94 : vector<1x48xf32> to vector<12x48xf32>
    %105 = arith.mulf %103, %104 : vector<12x48xf32>
    %106 = arith.addf %93, %105 : vector<12x48xf32>
    %107 = vector.extract_strided_slice %79 {offsets = [2, 0], sizes = [1, 48], strides = [1, 1]} : vector<4x48xf32> to vector<1x48xf32>
    %cst_47 = arith.constant 0.000000e+00 : f32
    %108 = vector.broadcast %cst_47 : f32 to vector<1x48xf32>
    %109 = arith.cmpf ogt, %107, %108 : vector<1x48xf32>
    %cst_48 = arith.constant 0xFF800000 : f32
    %110 = vector.shape_cast %109 : vector<1x48xi1> to vector<1x48xi1>
    %111 = vector.broadcast %110 : vector<1x48xi1> to vector<12x48xi1>
    %112 = vector.broadcast %cst_48 : f32 to vector<12x48xf32>
    %113 = arith.select %111, %74, %112 : vector<12x48xi1>, vector<12x48xf32>
    %cst_49 = arith.constant dense<0xFF800000> : vector<12xf32>
    %114 = vector.multi_reduction <maximumf>, %113, %cst_49 [1] : vector<12x48xf32> to vector<12xf32>
    %115 = vector.shape_cast %114 : vector<12xf32> to vector<12x1xf32>
    %116 = vector.broadcast %115 : vector<12x1xf32> to vector<12x48xf32>
    %117 = vector.broadcast %107 : vector<1x48xf32> to vector<12x48xf32>
    %118 = arith.mulf %116, %117 : vector<12x48xf32>
    %119 = arith.addf %106, %118 : vector<12x48xf32>
    %120 = vector.extract_strided_slice %79 {offsets = [3, 0], sizes = [1, 48], strides = [1, 1]} : vector<4x48xf32> to vector<1x48xf32>
    %cst_50 = arith.constant 0.000000e+00 : f32
    %121 = vector.broadcast %cst_50 : f32 to vector<1x48xf32>
    %122 = arith.cmpf ogt, %120, %121 : vector<1x48xf32>
    %cst_51 = arith.constant 0xFF800000 : f32
    %123 = vector.shape_cast %122 : vector<1x48xi1> to vector<1x48xi1>
    %124 = vector.broadcast %123 : vector<1x48xi1> to vector<12x48xi1>
    %125 = vector.broadcast %cst_51 : f32 to vector<12x48xf32>
    %126 = arith.select %124, %74, %125 : vector<12x48xi1>, vector<12x48xf32>
    %cst_52 = arith.constant dense<0xFF800000> : vector<12xf32>
    %127 = vector.multi_reduction <maximumf>, %126, %cst_52 [1] : vector<12x48xf32> to vector<12xf32>
    %128 = vector.shape_cast %127 : vector<12xf32> to vector<12x1xf32>
    %129 = vector.broadcast %128 : vector<12x1xf32> to vector<12x48xf32>
    %130 = vector.broadcast %120 : vector<1x48xf32> to vector<12x48xf32>
    %131 = arith.mulf %129, %130 : vector<12x48xf32>
    %132 = arith.addf %119, %131 : vector<12x48xf32>
    %133 = arith.subf %74, %132 : vector<12x48xf32>
    %134 = math.exp %133 : vector<12x48xf32>
    %cst_53 = arith.constant 0.000000e+00 : f32
    %135 = vector.broadcast %cst_53 : f32 to vector<12x48xf32>
    %136 = vector.extract_strided_slice %79 {offsets = [0, 0], sizes = [1, 48], strides = [1, 1]} : vector<4x48xf32> to vector<1x48xf32>
    %137 = vector.broadcast %136 : vector<1x48xf32> to vector<12x48xf32>
    %138 = arith.mulf %134, %137 : vector<12x48xf32>
    %cst_54 = arith.constant dense<0.000000e+00> : vector<12xf32>
    %139 = vector.multi_reduction <add>, %138, %cst_54 [1] : vector<12x48xf32> to vector<12xf32>
    %140 = vector.shape_cast %139 : vector<12xf32> to vector<12x1xf32>
    %141 = tpu.reciprocal %140 {approx = true} : vector<12x1xf32> -> vector<12x1xf32>
    %142 = vector.broadcast %141 : vector<12x1xf32> to vector<12x48xf32>
    %143 = vector.broadcast %136 : vector<1x48xf32> to vector<12x48xf32>
    %144 = arith.mulf %142, %143 : vector<12x48xf32>
    %145 = arith.addf %135, %144 : vector<12x48xf32>
    %146 = vector.extract_strided_slice %79 {offsets = [1, 0], sizes = [1, 48], strides = [1, 1]} : vector<4x48xf32> to vector<1x48xf32>
    %147 = vector.broadcast %146 : vector<1x48xf32> to vector<12x48xf32>
    %148 = arith.mulf %134, %147 : vector<12x48xf32>
    %cst_55 = arith.constant dense<0.000000e+00> : vector<12xf32>
    %149 = vector.multi_reduction <add>, %148, %cst_55 [1] : vector<12x48xf32> to vector<12xf32>
    %150 = vector.shape_cast %149 : vector<12xf32> to vector<12x1xf32>
    %151 = tpu.reciprocal %150 {approx = true} : vector<12x1xf32> -> vector<12x1xf32>
    %152 = vector.broadcast %151 : vector<12x1xf32> to vector<12x48xf32>
    %153 = vector.broadcast %146 : vector<1x48xf32> to vector<12x48xf32>
    %154 = arith.mulf %152, %153 : vector<12x48xf32>
    %155 = arith.addf %145, %154 : vector<12x48xf32>
    %156 = vector.extract_strided_slice %79 {offsets = [2, 0], sizes = [1, 48], strides = [1, 1]} : vector<4x48xf32> to vector<1x48xf32>
    %157 = vector.broadcast %156 : vector<1x48xf32> to vector<12x48xf32>
    %158 = arith.mulf %134, %157 : vector<12x48xf32>
    %cst_56 = arith.constant dense<0.000000e+00> : vector<12xf32>
    %159 = vector.multi_reduction <add>, %158, %cst_56 [1] : vector<12x48xf32> to vector<12xf32>
    %160 = vector.shape_cast %159 : vector<12xf32> to vector<12x1xf32>
    %161 = tpu.reciprocal %160 {approx = true} : vector<12x1xf32> -> vector<12x1xf32>
    %162 = vector.broadcast %161 : vector<12x1xf32> to vector<12x48xf32>
    %163 = vector.broadcast %156 : vector<1x48xf32> to vector<12x48xf32>
    %164 = arith.mulf %162, %163 : vector<12x48xf32>
    %165 = arith.addf %155, %164 : vector<12x48xf32>
    %166 = vector.extract_strided_slice %79 {offsets = [3, 0], sizes = [1, 48], strides = [1, 1]} : vector<4x48xf32> to vector<1x48xf32>
    %167 = vector.broadcast %166 : vector<1x48xf32> to vector<12x48xf32>
    %168 = arith.mulf %134, %167 : vector<12x48xf32>
    %cst_57 = arith.constant dense<0.000000e+00> : vector<12xf32>
    %169 = vector.multi_reduction <add>, %168, %cst_57 [1] : vector<12x48xf32> to vector<12xf32>
    %170 = vector.shape_cast %169 : vector<12xf32> to vector<12x1xf32>
    %171 = tpu.reciprocal %170 {approx = true} : vector<12x1xf32> -> vector<12x1xf32>
    %172 = vector.broadcast %171 : vector<12x1xf32> to vector<12x48xf32>
    %173 = vector.broadcast %166 : vector<1x48xf32> to vector<12x48xf32>
    %174 = arith.mulf %172, %173 : vector<12x48xf32>
    %175 = arith.addf %165, %174 : vector<12x48xf32>
    %176 = arith.mulf %134, %175 : vector<12x48xf32>
    %cst_58 = arith.constant dense<0.000000e+00> : vector<12x32xf32>
    %177 = tpu.matmul %176, %72, %cst_58 {dimension_numbers = #tpu.dot_dimension_numbers<[1], [0], [0], [1], [0, 0, 1, 1], [], []>} : vector<12x48xf32>, vector<48x32xf32>, vector<12x32xf32> -> vector<12x32xf32>
    %cst_59 = arith.constant 0.000000e+00 : f32
    %178 = vector.broadcast %cst_59 : f32 to vector<12x32xf32>
    %179 = arith.subf %178, %177 : vector<12x32xf32>
    %180 = math.exp %179 : vector<12x32xf32>
    %cst_60 = arith.constant 1.000000e+00 : f32
    %181 = vector.broadcast %cst_60 : f32 to vector<12x32xf32>
    %182 = arith.addf %181, %180 : vector<12x32xf32>
    %183 = tpu.reciprocal %182 {approx = true} : vector<12x32xf32> -> vector<12x32xf32>
    %184 = arith.mulf %177, %183 : vector<12x32xf32>
    %c384 = arith.constant 384 : index
    %c0_61 = arith.constant 0 : index
    %185 = vector.load %arg4[%c384, %c0_61] : memref<560x128xf32, #tpu.memory_space<vmem>>, vector<32x32xf32>
    %cst_62 = arith.constant dense<0.000000e+00> : vector<12x32xf32>
    %186 = tpu.matmul %26, %185, %cst_62 {dimension_numbers = #tpu.dot_dimension_numbers<[1], [0], [0], [1], [0, 0, 1, 1], [], []>} : vector<12x32xf32>, vector<32x32xf32>, vector<12x32xf32> -> vector<12x32xf32>
    %c416 = arith.constant 416 : index
    %c0_63 = arith.constant 0 : index
    %187 = vector.load %arg4[%c416, %c0_63] : memref<560x128xf32, #tpu.memory_space<vmem>>, vector<32x32xf32>
    %cst_64 = arith.constant dense<0.000000e+00> : vector<12x32xf32>
    %188 = tpu.matmul %184, %187, %cst_64 {dimension_numbers = #tpu.dot_dimension_numbers<[1], [0], [0], [1], [0, 0, 1, 1], [], []>} : vector<12x32xf32>, vector<32x32xf32>, vector<12x32xf32> -> vector<12x32xf32>
    %189 = arith.addf %186, %188 : vector<12x32xf32>
    %c448 = arith.constant 448 : index
    %c0_65 = arith.constant 0 : index
    %190 = vector.load %arg4[%c448, %c0_65] : memref<560x128xf32, #tpu.memory_space<vmem>>, vector<1x32xf32>
    %191 = vector.broadcast %190 : vector<1x32xf32> to vector<12x32xf32>
    %192 = arith.addf %189, %191 : vector<12x32xf32>
    %c0_66 = arith.constant 0 : index
    %c0_67 = arith.constant 0 : index
    %193 = vector.load %arg6[%c0_66, %c0_67] : memref<12x32xf32, #tpu.memory_space<vmem>>, vector<12x32xf32>
    tpu.vector_store %arg6[%c0_66, %c0_67], %192 {strides = array<i32>} : memref<12x32xf32, #tpu.memory_space<vmem>>, vector<12x32xf32>,
    %c0_68 = arith.constant 0 : index
    %c0_69 = arith.constant 0 : index
    %194 = vector.load %arg8[%c0_68, %c0_69] : memref<12x48xf32, #tpu.memory_space<vmem>>, vector<12x48xf32>
    tpu.vector_store %arg8[%c0_68, %c0_69], %78 {strides = array<i32>} : memref<12x48xf32, #tpu.memory_space<vmem>>, vector<12x48xf32>,
    %c0_70 = arith.constant 0 : index
    %c0_71 = arith.constant 0 : index
    %195 = vector.load %arg3[%c0_70, %c0_71] : memref<12x48xf32, #tpu.memory_space<vmem>>, vector<12x48xf32>
    %c0_72 = arith.constant 0 : index
    %c0_73 = arith.constant 0 : index
    %196 = vector.load %arg5[%c0_72, %c0_73] : memref<624x128xf32, #tpu.memory_space<vmem>>, vector<1x32xf32>
    %c8_74 = arith.constant 8 : index
    %c0_75 = arith.constant 0 : index
    %197 = vector.load %arg5[%c8_74, %c0_75] : memref<624x128xf32, #tpu.memory_space<vmem>>, vector<1x32xf32>
    %cst_76 = arith.constant dense<0.000000e+00> : vector<12xf32>
    %198 = vector.multi_reduction <add>, %1, %cst_76 [1] : vector<12x32xf32> to vector<12xf32>
    %199 = vector.shape_cast %198 : vector<12xf32> to vector<12x1xf32>
    %cst_77 = arith.constant 3.200000e+01 : f32
    %200 = vector.broadcast %cst_77 : f32 to vector<12x1xf32>
    %201 = arith.divf %199, %200 : vector<12x1xf32>
    %202 = vector.broadcast %201 : vector<12x1xf32> to vector<12x32xf32>
    %203 = arith.subf %1, %202 : vector<12x32xf32>
    %204 = arith.mulf %203, %203 : vector<12x32xf32>
    %cst_78 = arith.constant dense<0.000000e+00> : vector<12xf32>
    %205 = vector.multi_reduction <add>, %204, %cst_78 [1] : vector<12x32xf32> to vector<12xf32>
    %206 = vector.shape_cast %205 : vector<12xf32> to vector<12x1xf32>
    %cst_79 = arith.constant 3.200000e+01 : f32
    %207 = vector.broadcast %cst_79 : f32 to vector<12x1xf32>
    %208 = arith.divf %206, %207 : vector<12x1xf32>
    %209 = vector.broadcast %201 : vector<12x1xf32> to vector<12x32xf32>
    %210 = arith.subf %1, %209 : vector<12x32xf32>
    %cst_80 = arith.constant 9.99999974E-6 : f32
    %211 = vector.broadcast %cst_80 : f32 to vector<12x1xf32>
    %212 = arith.addf %208, %211 : vector<12x1xf32>
    %213 = math.rsqrt %212 : vector<12x1xf32>
    %214 = vector.broadcast %213 : vector<12x1xf32> to vector<12x32xf32>
    %215 = arith.mulf %210, %214 : vector<12x32xf32>
    %216 = vector.broadcast %196 : vector<1x32xf32> to vector<12x32xf32>
    %217 = arith.mulf %215, %216 : vector<12x32xf32>
    %218 = vector.broadcast %197 : vector<1x32xf32> to vector<12x32xf32>
    %219 = arith.addf %217, %218 : vector<12x32xf32>
    %c16_81 = arith.constant 16 : index
    %c0_82 = arith.constant 0 : index
    %220 = vector.load %arg5[%c16_81, %c0_82] : memref<624x128xf32, #tpu.memory_space<vmem>>, vector<1x32xf32>
    %c24_83 = arith.constant 24 : index
    %c0_84 = arith.constant 0 : index
    %221 = vector.load %arg5[%c24_83, %c0_84] : memref<624x128xf32, #tpu.memory_space<vmem>>, vector<1x32xf32>
    %cst_85 = arith.constant dense<0.000000e+00> : vector<12xf32>
    %222 = vector.multi_reduction <add>, %192, %cst_85 [1] : vector<12x32xf32> to vector<12xf32>
    %223 = vector.shape_cast %222 : vector<12xf32> to vector<12x1xf32>
    %cst_86 = arith.constant 3.200000e+01 : f32
    %224 = vector.broadcast %cst_86 : f32 to vector<12x1xf32>
    %225 = arith.divf %223, %224 : vector<12x1xf32>
    %226 = vector.broadcast %225 : vector<12x1xf32> to vector<12x32xf32>
    %227 = arith.subf %192, %226 : vector<12x32xf32>
    %228 = arith.mulf %227, %227 : vector<12x32xf32>
    %cst_87 = arith.constant dense<0.000000e+00> : vector<12xf32>
    %229 = vector.multi_reduction <add>, %228, %cst_87 [1] : vector<12x32xf32> to vector<12xf32>
    %230 = vector.shape_cast %229 : vector<12xf32> to vector<12x1xf32>
    %cst_88 = arith.constant 3.200000e+01 : f32
    %231 = vector.broadcast %cst_88 : f32 to vector<12x1xf32>
    %232 = arith.divf %230, %231 : vector<12x1xf32>
    %233 = vector.broadcast %225 : vector<12x1xf32> to vector<12x32xf32>
    %234 = arith.subf %192, %233 : vector<12x32xf32>
    %cst_89 = arith.constant 9.99999974E-6 : f32
    %235 = vector.broadcast %cst_89 : f32 to vector<12x1xf32>
    %236 = arith.addf %232, %235 : vector<12x1xf32>
    %237 = math.rsqrt %236 : vector<12x1xf32>
    %238 = vector.broadcast %237 : vector<12x1xf32> to vector<12x32xf32>
    %239 = arith.mulf %234, %238 : vector<12x32xf32>
    %240 = vector.broadcast %220 : vector<1x32xf32> to vector<12x32xf32>
    %241 = arith.mulf %239, %240 : vector<12x32xf32>
    %242 = vector.broadcast %221 : vector<1x32xf32> to vector<12x32xf32>
    %243 = arith.addf %241, %242 : vector<12x32xf32>
    %c32_90 = arith.constant 32 : index
    %c0_91 = arith.constant 0 : index
    %244 = vector.load %arg5[%c32_90, %c0_91] : memref<624x128xf32, #tpu.memory_space<vmem>>, vector<32x64xf32>
    %cst_92 = arith.constant dense<0.000000e+00> : vector<12x64xf32>
    %245 = tpu.matmul %219, %244, %cst_92 {dimension_numbers = #tpu.dot_dimension_numbers<[1], [0], [0], [1], [0, 0, 1, 1], [], []>} : vector<12x32xf32>, vector<32x64xf32>, vector<12x64xf32> -> vector<12x64xf32>
    %c64_93 = arith.constant 64 : index
    %c0_94 = arith.constant 0 : index
    %246 = vector.load %arg5[%c64_93, %c0_94] : memref<624x128xf32, #tpu.memory_space<vmem>>, vector<12x64xf32>
    %247 = arith.mulf %245, %246 : vector<12x64xf32>
    %c144 = arith.constant 144 : index
    %c0_95 = arith.constant 0 : index
    %248 = vector.load %arg5[%c144, %c0_95] : memref<624x128xf32, #tpu.memory_space<vmem>>, vector<32x128xf32>
    %cst_96 = arith.constant dense<0.000000e+00> : vector<12x128xf32>
    %249 = tpu.matmul %243, %248, %cst_96 {dimension_numbers = #tpu.dot_dimension_numbers<[1], [0], [0], [1], [0, 0, 1, 1], [], []>} : vector<12x32xf32>, vector<32x128xf32>, vector<12x128xf32> -> vector<12x128xf32>
    %c176 = arith.constant 176 : index
    %c0_97 = arith.constant 0 : index
    %250 = vector.load %arg5[%c176, %c0_97] : memref<624x128xf32, #tpu.memory_space<vmem>>, vector<12x128xf32>
    %251 = arith.mulf %249, %250 : vector<12x128xf32>
    %c80_98 = arith.constant 80 : index
    %c0_99 = arith.constant 0 : index
    %252 = vector.load %arg5[%c80_98, %c0_99] : memref<624x128xf32, #tpu.memory_space<vmem>>, vector<64x32xf32>
    %cst_100 = arith.constant dense<0.000000e+00> : vector<12x32xf32>
    %253 = tpu.matmul %247, %252, %cst_100 {dimension_numbers = #tpu.dot_dimension_numbers<[1], [0], [0], [1], [0, 0, 1, 1], [], []>} : vector<12x64xf32>, vector<64x32xf32>, vector<12x32xf32> -> vector<12x32xf32>
    %cst_101 = arith.constant 0.353553385 : f32
    %254 = vector.broadcast %cst_101 : f32 to vector<12x32xf32>
    %255 = arith.mulf %253, %254 : vector<12x32xf32>
    %c192 = arith.constant 192 : index
    %c0_102 = arith.constant 0 : index
    %256 = vector.load %arg5[%c192, %c0_102] : memref<624x128xf32, #tpu.memory_space<vmem>>, vector<128x32xf32>
    %cst_103 = arith.constant dense<0.000000e+00> : vector<12x32xf32>
    %257 = tpu.matmul %251, %256, %cst_103 {dimension_numbers = #tpu.dot_dimension_numbers<[1], [0], [0], [1], [0, 0, 1, 1], [], []>} : vector<12x128xf32>, vector<128x32xf32>, vector<12x32xf32> -> vector<12x32xf32>
    %c320_104 = arith.constant 320 : index
    %c0_105 = arith.constant 0 : index
    %258 = vector.load %arg5[%c320_104, %c0_105] : memref<624x128xf32, #tpu.memory_space<vmem>>, vector<128x32xf32>
    %cst_106 = arith.constant dense<0.000000e+00> : vector<12x32xf32>
    %259 = tpu.matmul %251, %258, %cst_106 {dimension_numbers = #tpu.dot_dimension_numbers<[1], [0], [0], [1], [0, 0, 1, 1], [], []>} : vector<12x128xf32>, vector<128x32xf32>, vector<12x32xf32> -> vector<12x32xf32>
    %c520 = arith.constant 520 : index
    %c0_107 = arith.constant 0 : index
    %260 = vector.load %arg5[%c520, %c0_107] : memref<624x128xf32, #tpu.memory_space<vmem>>, vector<48x12xf32>
    %c568 = arith.constant 568 : index
    %c0_108 = arith.constant 0 : index
    %261 = vector.load %arg5[%c568, %c0_108] : memref<624x128xf32, #tpu.memory_space<vmem>>, vector<48x32xf32>
    %cst_109 = arith.constant dense<0.000000e+00> : vector<48x32xf32>
    %262 = tpu.matmul %260, %257, %cst_109 {dimension_numbers = #tpu.dot_dimension_numbers<[1], [0], [0], [1], [0, 0, 1, 1], [], []>} : vector<48x12xf32>, vector<12x32xf32>, vector<48x32xf32> -> vector<48x32xf32>
    %263 = arith.mulf %262, %261 : vector<48x32xf32>
    %cst_110 = arith.constant dense<0.000000e+00> : vector<48x32xf32>
    %264 = tpu.matmul %260, %259, %cst_110 {dimension_numbers = #tpu.dot_dimension_numbers<[1], [0], [0], [1], [0, 0, 1, 1], [], []>} : vector<48x12xf32>, vector<12x32xf32>, vector<48x32xf32> -> vector<48x32xf32>
    %265 = arith.mulf %264, %261 : vector<48x32xf32>
    %cst_111 = arith.constant dense<0.000000e+00> : vector<12x48xf32>
    %266 = tpu.matmul %255, %263, %cst_111 {dimension_numbers = #tpu.dot_dimension_numbers<[1], [1], [0], [0], [0, 0, 1, 0], [], []>} : vector<12x32xf32>, vector<48x32xf32>, vector<12x48xf32> -> vector<12x48xf32>
    %267 = arith.addf %266, %195 : vector<12x48xf32>
    %cst_112 = arith.constant 0.000000e+00 : f32
    %268 = vector.broadcast %cst_112 : f32 to vector<12x48xf32>
    %269 = arith.cmpf olt, %195, %268 : vector<12x48xf32>
    %cst_113 = arith.constant 0xFF800000 : f32
    %270 = vector.broadcast %cst_113 : f32 to vector<12x48xf32>
    %271 = arith.select %269, %270, %267 : vector<12x48xi1>, vector<12x48xf32>
    %c616 = arith.constant 616 : index
    %c0_114 = arith.constant 0 : index
    %272 = vector.load %arg5[%c616, %c0_114] : memref<624x128xf32, #tpu.memory_space<vmem>>, vector<4x48xf32>
    %cst_115 = arith.constant 0.000000e+00 : f32
    %273 = vector.broadcast %cst_115 : f32 to vector<12x48xf32>
    %274 = vector.extract_strided_slice %272 {offsets = [0, 0], sizes = [1, 48], strides = [1, 1]} : vector<4x48xf32> to vector<1x48xf32>
    %cst_116 = arith.constant 0.000000e+00 : f32
    %275 = vector.broadcast %cst_116 : f32 to vector<1x48xf32>
    %276 = arith.cmpf ogt, %274, %275 : vector<1x48xf32>
    %cst_117 = arith.constant 0xFF800000 : f32
    %277 = vector.shape_cast %276 : vector<1x48xi1> to vector<1x48xi1>
    %278 = vector.broadcast %277 : vector<1x48xi1> to vector<12x48xi1>
    %279 = vector.broadcast %cst_117 : f32 to vector<12x48xf32>
    %280 = arith.select %278, %267, %279 : vector<12x48xi1>, vector<12x48xf32>
    %cst_118 = arith.constant dense<0xFF800000> : vector<12xf32>
    %281 = vector.multi_reduction <maximumf>, %280, %cst_118 [1] : vector<12x48xf32> to vector<12xf32>
    %282 = vector.shape_cast %281 : vector<12xf32> to vector<12x1xf32>
    %283 = vector.broadcast %282 : vector<12x1xf32> to vector<12x48xf32>
    %284 = vector.broadcast %274 : vector<1x48xf32> to vector<12x48xf32>
    %285 = arith.mulf %283, %284 : vector<12x48xf32>
    %286 = arith.addf %273, %285 : vector<12x48xf32>
    %287 = vector.extract_strided_slice %272 {offsets = [1, 0], sizes = [1, 48], strides = [1, 1]} : vector<4x48xf32> to vector<1x48xf32>
    %cst_119 = arith.constant 0.000000e+00 : f32
    %288 = vector.broadcast %cst_119 : f32 to vector<1x48xf32>
    %289 = arith.cmpf ogt, %287, %288 : vector<1x48xf32>
    %cst_120 = arith.constant 0xFF800000 : f32
    %290 = vector.shape_cast %289 : vector<1x48xi1> to vector<1x48xi1>
    %291 = vector.broadcast %290 : vector<1x48xi1> to vector<12x48xi1>
    %292 = vector.broadcast %cst_120 : f32 to vector<12x48xf32>
    %293 = arith.select %291, %267, %292 : vector<12x48xi1>, vector<12x48xf32>
    %cst_121 = arith.constant dense<0xFF800000> : vector<12xf32>
    %294 = vector.multi_reduction <maximumf>, %293, %cst_121 [1] : vector<12x48xf32> to vector<12xf32>
    %295 = vector.shape_cast %294 : vector<12xf32> to vector<12x1xf32>
    %296 = vector.broadcast %295 : vector<12x1xf32> to vector<12x48xf32>
    %297 = vector.broadcast %287 : vector<1x48xf32> to vector<12x48xf32>
    %298 = arith.mulf %296, %297 : vector<12x48xf32>
    %299 = arith.addf %286, %298 : vector<12x48xf32>
    %300 = vector.extract_strided_slice %272 {offsets = [2, 0], sizes = [1, 48], strides = [1, 1]} : vector<4x48xf32> to vector<1x48xf32>
    %cst_122 = arith.constant 0.000000e+00 : f32
    %301 = vector.broadcast %cst_122 : f32 to vector<1x48xf32>
    %302 = arith.cmpf ogt, %300, %301 : vector<1x48xf32>
    %cst_123 = arith.constant 0xFF800000 : f32
    %303 = vector.shape_cast %302 : vector<1x48xi1> to vector<1x48xi1>
    %304 = vector.broadcast %303 : vector<1x48xi1> to vector<12x48xi1>
    %305 = vector.broadcast %cst_123 : f32 to vector<12x48xf32>
    %306 = arith.select %304, %267, %305 : vector<12x48xi1>, vector<12x48xf32>
    %cst_124 = arith.constant dense<0xFF800000> : vector<12xf32>
    %307 = vector.multi_reduction <maximumf>, %306, %cst_124 [1] : vector<12x48xf32> to vector<12xf32>
    %308 = vector.shape_cast %307 : vector<12xf32> to vector<12x1xf32>
    %309 = vector.broadcast %308 : vector<12x1xf32> to vector<12x48xf32>
    %310 = vector.broadcast %300 : vector<1x48xf32> to vector<12x48xf32>
    %311 = arith.mulf %309, %310 : vector<12x48xf32>
    %312 = arith.addf %299, %311 : vector<12x48xf32>
    %313 = vector.extract_strided_slice %272 {offsets = [3, 0], sizes = [1, 48], strides = [1, 1]} : vector<4x48xf32> to vector<1x48xf32>
    %cst_125 = arith.constant 0.000000e+00 : f32
    %314 = vector.broadcast %cst_125 : f32 to vector<1x48xf32>
    %315 = arith.cmpf ogt, %313, %314 : vector<1x48xf32>
    %cst_126 = arith.constant 0xFF800000 : f32
    %316 = vector.shape_cast %315 : vector<1x48xi1> to vector<1x48xi1>
    %317 = vector.broadcast %316 : vector<1x48xi1> to vector<12x48xi1>
    %318 = vector.broadcast %cst_126 : f32 to vector<12x48xf32>
    %319 = arith.select %317, %267, %318 : vector<12x48xi1>, vector<12x48xf32>
    %cst_127 = arith.constant dense<0xFF800000> : vector<12xf32>
    %320 = vector.multi_reduction <maximumf>, %319, %cst_127 [1] : vector<12x48xf32> to vector<12xf32>
    %321 = vector.shape_cast %320 : vector<12xf32> to vector<12x1xf32>
    %322 = vector.broadcast %321 : vector<12x1xf32> to vector<12x48xf32>
    %323 = vector.broadcast %313 : vector<1x48xf32> to vector<12x48xf32>
    %324 = arith.mulf %322, %323 : vector<12x48xf32>
    %325 = arith.addf %312, %324 : vector<12x48xf32>
    %326 = arith.subf %267, %325 : vector<12x48xf32>
    %327 = math.exp %326 : vector<12x48xf32>
    %cst_128 = arith.constant 0.000000e+00 : f32
    %328 = vector.broadcast %cst_128 : f32 to vector<12x48xf32>
    %329 = vector.extract_strided_slice %272 {offsets = [0, 0], sizes = [1, 48], strides = [1, 1]} : vector<4x48xf32> to vector<1x48xf32>
    %330 = vector.broadcast %329 : vector<1x48xf32> to vector<12x48xf32>
    %331 = arith.mulf %327, %330 : vector<12x48xf32>
    %cst_129 = arith.constant dense<0.000000e+00> : vector<12xf32>
    %332 = vector.multi_reduction <add>, %331, %cst_129 [1] : vector<12x48xf32> to vector<12xf32>
    %333 = vector.shape_cast %332 : vector<12xf32> to vector<12x1xf32>
    %334 = tpu.reciprocal %333 {approx = true} : vector<12x1xf32> -> vector<12x1xf32>
    %335 = vector.broadcast %334 : vector<12x1xf32> to vector<12x48xf32>
    %336 = vector.broadcast %329 : vector<1x48xf32> to vector<12x48xf32>
    %337 = arith.mulf %335, %336 : vector<12x48xf32>
    %338 = arith.addf %328, %337 : vector<12x48xf32>
    %339 = vector.extract_strided_slice %272 {offsets = [1, 0], sizes = [1, 48], strides = [1, 1]} : vector<4x48xf32> to vector<1x48xf32>
    %340 = vector.broadcast %339 : vector<1x48xf32> to vector<12x48xf32>
    %341 = arith.mulf %327, %340 : vector<12x48xf32>
    %cst_130 = arith.constant dense<0.000000e+00> : vector<12xf32>
    %342 = vector.multi_reduction <add>, %341, %cst_130 [1] : vector<12x48xf32> to vector<12xf32>
    %343 = vector.shape_cast %342 : vector<12xf32> to vector<12x1xf32>
    %344 = tpu.reciprocal %343 {approx = true} : vector<12x1xf32> -> vector<12x1xf32>
    %345 = vector.broadcast %344 : vector<12x1xf32> to vector<12x48xf32>
    %346 = vector.broadcast %339 : vector<1x48xf32> to vector<12x48xf32>
    %347 = arith.mulf %345, %346 : vector<12x48xf32>
    %348 = arith.addf %338, %347 : vector<12x48xf32>
    %349 = vector.extract_strided_slice %272 {offsets = [2, 0], sizes = [1, 48], strides = [1, 1]} : vector<4x48xf32> to vector<1x48xf32>
    %350 = vector.broadcast %349 : vector<1x48xf32> to vector<12x48xf32>
    %351 = arith.mulf %327, %350 : vector<12x48xf32>
    %cst_131 = arith.constant dense<0.000000e+00> : vector<12xf32>
    %352 = vector.multi_reduction <add>, %351, %cst_131 [1] : vector<12x48xf32> to vector<12xf32>
    %353 = vector.shape_cast %352 : vector<12xf32> to vector<12x1xf32>
    %354 = tpu.reciprocal %353 {approx = true} : vector<12x1xf32> -> vector<12x1xf32>
    %355 = vector.broadcast %354 : vector<12x1xf32> to vector<12x48xf32>
    %356 = vector.broadcast %349 : vector<1x48xf32> to vector<12x48xf32>
    %357 = arith.mulf %355, %356 : vector<12x48xf32>
    %358 = arith.addf %348, %357 : vector<12x48xf32>
    %359 = vector.extract_strided_slice %272 {offsets = [3, 0], sizes = [1, 48], strides = [1, 1]} : vector<4x48xf32> to vector<1x48xf32>
    %360 = vector.broadcast %359 : vector<1x48xf32> to vector<12x48xf32>
    %361 = arith.mulf %327, %360 : vector<12x48xf32>
    %cst_132 = arith.constant dense<0.000000e+00> : vector<12xf32>
    %362 = vector.multi_reduction <add>, %361, %cst_132 [1] : vector<12x48xf32> to vector<12xf32>
    %363 = vector.shape_cast %362 : vector<12xf32> to vector<12x1xf32>
    %364 = tpu.reciprocal %363 {approx = true} : vector<12x1xf32> -> vector<12x1xf32>
    %365 = vector.broadcast %364 : vector<12x1xf32> to vector<12x48xf32>
    %366 = vector.broadcast %359 : vector<1x48xf32> to vector<12x48xf32>
    %367 = arith.mulf %365, %366 : vector<12x48xf32>
    %368 = arith.addf %358, %367 : vector<12x48xf32>
    %369 = arith.mulf %327, %368 : vector<12x48xf32>
    %cst_133 = arith.constant dense<0.000000e+00> : vector<12x32xf32>
    %370 = tpu.matmul %369, %265, %cst_133 {dimension_numbers = #tpu.dot_dimension_numbers<[1], [0], [0], [1], [0, 0, 1, 1], [], []>} : vector<12x48xf32>, vector<48x32xf32>, vector<12x32xf32> -> vector<12x32xf32>
    %cst_134 = arith.constant 0.000000e+00 : f32
    %371 = vector.broadcast %cst_134 : f32 to vector<12x32xf32>
    %372 = arith.subf %371, %370 : vector<12x32xf32>
    %373 = math.exp %372 : vector<12x32xf32>
    %cst_135 = arith.constant 1.000000e+00 : f32
    %374 = vector.broadcast %cst_135 : f32 to vector<12x32xf32>
    %375 = arith.addf %374, %373 : vector<12x32xf32>
    %376 = tpu.reciprocal %375 {approx = true} : vector<12x32xf32> -> vector<12x32xf32>
    %377 = arith.mulf %370, %376 : vector<12x32xf32>
    %c448_136 = arith.constant 448 : index
    %c0_137 = arith.constant 0 : index
    %378 = vector.load %arg5[%c448_136, %c0_137] : memref<624x128xf32, #tpu.memory_space<vmem>>, vector<32x32xf32>
    %cst_138 = arith.constant dense<0.000000e+00> : vector<12x32xf32>
    %379 = tpu.matmul %219, %378, %cst_138 {dimension_numbers = #tpu.dot_dimension_numbers<[1], [0], [0], [1], [0, 0, 1, 1], [], []>} : vector<12x32xf32>, vector<32x32xf32>, vector<12x32xf32> -> vector<12x32xf32>
    %c480 = arith.constant 480 : index
    %c0_139 = arith.constant 0 : index
    %380 = vector.load %arg5[%c480, %c0_139] : memref<624x128xf32, #tpu.memory_space<vmem>>, vector<32x32xf32>
    %cst_140 = arith.constant dense<0.000000e+00> : vector<12x32xf32>
    %381 = tpu.matmul %377, %380, %cst_140 {dimension_numbers = #tpu.dot_dimension_numbers<[1], [0], [0], [1], [0, 0, 1, 1], [], []>} : vector<12x32xf32>, vector<32x32xf32>, vector<12x32xf32> -> vector<12x32xf32>
    %382 = arith.addf %379, %381 : vector<12x32xf32>
    %c512 = arith.constant 512 : index
    %c0_141 = arith.constant 0 : index
    %383 = vector.load %arg5[%c512, %c0_141] : memref<624x128xf32, #tpu.memory_space<vmem>>, vector<1x32xf32>
    %384 = vector.broadcast %383 : vector<1x32xf32> to vector<12x32xf32>
    %385 = arith.addf %382, %384 : vector<12x32xf32>
    %c0_142 = arith.constant 0 : index
    %c0_143 = arith.constant 0 : index
    %386 = vector.load %arg7[%c0_142, %c0_143] : memref<12x32xf32, #tpu.memory_space<vmem>>, vector<12x32xf32>
    tpu.vector_store %arg7[%c0_142, %c0_143], %385 {strides = array<i32>} : memref<12x32xf32, #tpu.memory_space<vmem>>, vector<12x32xf32>,
    %c0_144 = arith.constant 0 : index
    %c0_145 = arith.constant 0 : index
    %387 = vector.load %arg9[%c0_144, %c0_145] : memref<12x48xf32, #tpu.memory_space<vmem>>, vector<12x48xf32>
    tpu.vector_store %arg9[%c0_144, %c0_145], %271 {strides = array<i32>} : memref<12x48xf32, #tpu.memory_space<vmem>>, vector<12x48xf32>,
    return
  }
}

</mosaic_0001>

<llo_original>
// kernel: tpu_custom_call.1
$region0: #{tpu_custom_call.1}
  #allocation0 [shape = 'u32[]', space=smem, size = 0x4, offset = 0x4, fixed_abs, tag = 'smem constant byte address 0x4 - core index']
  #allocation1 [shape = 'u32[72,128]{1,0:T(1,128)}', space=vmem, size = 0x9000, scoped, tag = 'internal scratch']
  %s0 = inlined_call_operand.hbm [shape: f32[12,32], index: 0, kind: input, shape index: {}]
  %s1 = inlined_call_operand.hbm [shape: f32[12,32], index: 1, kind: input, shape index: {}]
  %s2 = inlined_call_operand.hbm [shape: f32[12,48], index: 2, kind: input, shape index: {}]
  %s3 = inlined_call_operand.hbm [shape: f32[12,48], index: 3, kind: input, shape index: {}]
  %s4 = inlined_call_operand.hbm [shape: f32[560,128], index: 4, kind: input, shape index: {}]
  %s5 = inlined_call_operand.hbm [shape: f32[624,128], index: 5, kind: input, shape index: {}]
  %s6 = inlined_call_operand.hbm [shape: f32[12,32], index: 6, kind: output, shape index: {0}]
  %s7 = inlined_call_operand.hbm [shape: f32[12,32], index: 7, kind: output, shape index: {1}]
  %s8 = inlined_call_operand.hbm [shape: f32[12,48], index: 8, kind: output, shape index: {2}]
  %s9 = inlined_call_operand.hbm [shape: f32[12,48], index: 9, kind: output, shape index: {3}]
  %10 = xla_tuple %s6, %s7, %s8, %s9
  %s11 = sld [smem:[#allocation0]]
  $region82: #{tpu_custom_call.1} parent=0
    _
  %s13 = ssub.s32 1, %s11
  %s14 = scalar_select 0, %s13, %s11
  $region1: #{tpu_custom_call.1} parent=0
    #allocation2 [shape = 'u8[8192]{0}', space=vmem, size = 0x2000, scoped, tag = 'input window, operand 0, single buffered']
    #allocation3 [shape = 's32[1]{0}', space=sflag, size = 0x4, scoped, tag = 'scoped memory for tpu_custom_call.1']
    #allocation4 [shape = 's32[1]{0}', space=sflag, size = 0x4, scoped, tag = 'scoped memory for tpu_custom_call.1']
    #allocation5 [shape = 'u8[8192]{0}', space=vmem, size = 0x2000, scoped, tag = 'input window, operand 1, single buffered']
    #allocation6 [shape = 's32[1]{0}', space=sflag, size = 0x4, scoped, tag = 'scoped memory for tpu_custom_call.1']
    #allocation7 [shape = 'u8[8192]{0}', space=vmem, size = 0x2000, scoped, tag = 'input window, operand 2, single buffered']
    #allocation8 [shape = 'u8[8192]{0}', space=vmem, size = 0x2000, scoped, tag = 'input window, operand 3, single buffered']
    #allocation9 [shape = 's32[1]{0}', space=sflag, size = 0x4, scoped, tag = 'scoped memory for tpu_custom_call.1']
    #allocation10 [shape = 'u8[286720]{0}', space=vmem, size = 0x46000, scoped, tag = 'input window, operand 4, single buffered']
    #allocation11 [shape = 'u8[319488]{0}', space=vmem, size = 0x4e000, scoped, tag = 'input window, operand 5, single buffered']
    #allocation12 [shape = 's32[1]{0}', space=sflag, size = 0x4, scoped, tag = 'scoped memory for tpu_custom_call.1']
    #allocation13 [shape = 'u8[8192]{0}', space=vmem, size = 0x2000, scoped, tag = 'output window, operand 0, single buffered']
    #allocation14 [shape = 'u8[8192]{0}', space=vmem, size = 0x2000, scoped, tag = 'output window, operand 1, single buffered']
    #allocation15 [shape = 's32[1]{0}', space=sflag, size = 0x4, scoped, tag = 'scoped memory for tpu_custom_call.1']
    #allocation16 [shape = 'u8[8192]{0}', space=vmem, size = 0x2000, scoped, tag = 'output window, operand 2, single buffered']
    #allocation17 [shape = 'u8[8192]{0}', space=vmem, size = 0x2000, scoped, tag = 'output window, operand 3, single buffered']
    #allocation18 [shape = 's32[1]{0}', space=sflag, size = 0x4, scoped, tag = 'scoped memory for tpu_custom_call.1']
    %15 = vsyncpa [#allocation3], 0
    %16 = vsyncpa [#allocation6], 0
    %17 = vsyncpa [#allocation9], 0
    %18 = vsyncpa [#allocation12], 0
    %19 = vsyncpa [#allocation4], 0
    %20 = vsyncpa [#allocation15], 0
    %21 = vsyncpa [#allocation18], 0
    // Predicated region
    $region2: #{tpu_custom_call.1} parent=1 // pred_check
      _
    $region3: #{tpu_custom_call.1} parent=1 // pred_check_branch
      %23 = sbr.rel (0) target = $region5
    $region4: #{tpu_custom_call.1} parent=1 // pred_region
      %25 = vsyncadd [#allocation3], 0
      %s26 = sshll.u32 %s0, 4
      %s27 = int_to_ptr.hbm [resolvable:$true] %s26
      %s28 = sshll.u32 [#allocation2], 4
      %s29 = int_to_ptr.vmem [resolvable:$true] %s28
      %34 = dma.hbm_to_vmem [thread:$0]  %s27, 256, %s29, [#allocation3], 128, 128, 8
    $region5: #{tpu_custom_call.1} parent=1 // pred_fallthru
      _
    // Predicated region
    $region6: #{tpu_custom_call.1} parent=1 // pred_check
      _
    $region7: #{tpu_custom_call.1} parent=1 // pred_check_branch
      %36 = sbr.rel (0) target = $region9
    $region8: #{tpu_custom_call.1} parent=1 // pred_region
      %38 = vsyncadd [#allocation6], 0
      %s39 = sshll.u32 %s1, 4
      %s40 = int_to_ptr.hbm [resolvable:$true] %s39
      %s41 = sshll.u32 [#allocation5], 4
      %s42 = int_to_ptr.vmem [resolvable:$true] %s41
      %47 = dma.hbm_to_vmem [thread:$0]  %s40, 256, %s42, [#allocation6], 128, 128, 8
    $region9: #{tpu_custom_call.1} parent=1 // pred_fallthru
      _
    // Predicated region
    $region10: #{tpu_custom_call.1} parent=1 // pred_check
      _
    $region11: #{tpu_custom_call.1} parent=1 // pred_check_branch
      %49 = sbr.rel (0) target = $region13
    $region12: #{tpu_custom_call.1} parent=1 // pred_region
      %51 = vsyncadd [#allocation6], 0
      %s52 = sshll.u32 %s2, 4
      %s53 = int_to_ptr.hbm [resolvable:$true] %s52
      %s54 = sshll.u32 [#allocation7], 4
      %s55 = int_to_ptr.vmem [resolvable:$true] %s54
      %60 = dma.hbm_to_vmem [thread:$0]  %s53, 256, %s55, [#allocation6], 128, 128, 8
    $region13: #{tpu_custom_call.1} parent=1 // pred_fallthru
      _
    // Predicated region
    $region14: #{tpu_custom_call.1} parent=1 // pred_check
      _
    $region15: #{tpu_custom_call.1} parent=1 // pred_check_branch
      %62 = sbr.rel (0) target = $region17
    $region16: #{tpu_custom_call.1} parent=1 // pred_region
      %64 = vsyncadd [#allocation9], 0
      %s65 = sshll.u32 %s3, 4
      %s66 = int_to_ptr.hbm [resolvable:$true] %s65
      %s67 = sshll.u32 [#allocation8], 4
      %s68 = int_to_ptr.vmem [resolvable:$true] %s67
      %73 = dma.hbm_to_vmem [thread:$0]  %s66, 256, %s68, [#allocation9], 128, 128, 8
    $region17: #{tpu_custom_call.1} parent=1 // pred_fallthru
      _
    // Predicated region
    $region18: #{tpu_custom_call.1} parent=1 // pred_check
      _
    $region19: #{tpu_custom_call.1} parent=1 // pred_check_branch
      %75 = sbr.rel (0) target = $region21
    $region20: #{tpu_custom_call.1} parent=1 // pred_region
      %77 = vsyncadd [#allocation9], 0
      %s78 = sshll.u32 %s4, 4
      %s79 = int_to_ptr.hbm [resolvable:$true] %s78
      %s80 = sshll.u32 [#allocation10], 4
      %s81 = int_to_ptr.vmem [resolvable:$true] %s80
      %86 = dma.hbm_to_vmem [thread:$0]  %s79, 8960, %s81, [#allocation9], 128, 128, 8
    $region21: #{tpu_custom_call.1} parent=1 // pred_fallthru
      _
    // Predicated region
    $region22: #{tpu_custom_call.1} parent=1 // pred_check
      _
    $region23: #{tpu_custom_call.1} parent=1 // pred_check_branch
      %88 = sbr.rel (0) target = $region25
    $region24: #{tpu_custom_call.1} parent=1 // pred_region
      %90 = vsyncadd [#allocation12], 0
      %s91 = sshll.u32 %s5, 4
      %s92 = int_to_ptr.hbm [resolvable:$true] %s91
      %s93 = sshll.u32 [#allocation11], 4
      %s94 = int_to_ptr.vmem [resolvable:$true] %s93
      %99 = dma.hbm_to_vmem [thread:$0]  %s92, 9984, %s94, [#allocation12], 128, 128, 8
    $region25: #{tpu_custom_call.1} parent=1 // pred_fallthru
      _
    // Predicated region
    $region26: #{tpu_custom_call.1} parent=1 // pred_check
      _
    $region27: #{tpu_custom_call.1} parent=1 // pred_check_branch
      %101 = sbr.rel (0) target = $region29
    $region28: #{tpu_custom_call.1} parent=1 // pred_region
      %103 = dma.done [#allocation3], 256
    $region29: #{tpu_custom_call.1} parent=1 // pred_fallthru
      _
    // Predicated region
    $region30: #{tpu_custom_call.1} parent=1 // pred_check
      _
    $region31: #{tpu_custom_call.1} parent=1 // pred_check_branch
      %105 = sbr.rel (0) target = $region33
    $region32: #{tpu_custom_call.1} parent=1 // pred_region
      %107 = dma.done [#allocation6], 256
    $region33: #{tpu_custom_call.1} parent=1 // pred_fallthru
      _
    // Predicated region
    $region34: #{tpu_custom_call.1} parent=1 // pred_check
      _
    $region35: #{tpu_custom_call.1} parent=1 // pred_check_branch
      %109 = sbr.rel (0) target = $region37
    $region36: #{tpu_custom_call.1} parent=1 // pred_region
      %111 = dma.done [#allocation6], 256
    $region37: #{tpu_custom_call.1} parent=1 // pred_fallthru
      _
    // Predicated region
    $region38: #{tpu_custom_call.1} parent=1 // pred_check
      _
    $region39: #{tpu_custom_call.1} parent=1 // pred_check_branch
      %113 = sbr.rel (0) target = $region41
    $region40: #{tpu_custom_call.1} parent=1 // pred_region
      %115 = dma.done [#allocation9], 256
    $region41: #{tpu_custom_call.1} parent=1 // pred_fallthru
      _
    // Predicated region
    $region42: #{tpu_custom_call.1} parent=1 // pred_check
      _
    $region43: #{tpu_custom_call.1} parent=1 // pred_check_branch
      %117 = sbr.rel (0) target = $region45
    $region44: #{tpu_custom_call.1} parent=1 // pred_region
      %119 = dma.done [#allocation9], 8960
    $region45: #{tpu_custom_call.1} parent=1 // pred_fallthru
      _
    // Predicated region
    $region46: #{tpu_custom_call.1} parent=1 // pred_check
      _
    $region47: #{tpu_custom_call.1} parent=1 // pred_check_branch
      %121 = sbr.rel (0) target = $region49
    $region48: #{tpu_custom_call.1} parent=1 // pred_region
      %123 = dma.done [#allocation12], 9984
    $region49: #{tpu_custom_call.1} parent=1 // pred_fallthru
      _
    %v124 = vld [vmem:[#allocation2] sm:$0xff]
    %v125 = vld [vmem:[#allocation2 + $0x8] sm:$0xf]
    %v126 = vld [vmem:[#allocation5] sm:$0xff]
    %v127 = vld [vmem:[#allocation5 + $0x8] sm:$0xf]
    %v128 = vld [vmem:[#allocation7] sm:$0xff]
    %v129 = vld [vmem:[#allocation7 + $0x8] sm:$0xf]
    %v130 = vld [vmem:[#allocation10] sm:$0x1]
    %v131 = vld [vmem:[#allocation10 + $0x8] sm:$0x1]
    %vm132 = vcmask 261120
    %v133 = vsel %vm132, %v124, 0.0
    %134 = vadd.xlane.f32.xlu0 %v133
    %v135 = vpop.xlane.xlu0 %134
    %vm136 = vcmask 257024
    %v137 = vsel %vm136, %v125, 0.0
    %138 = vadd.xlane.f32.xlu0 %v137
    %v139 = vpop.xlane.xlu0 %138
    %v140 = vrcp.pop 32.0
    %v141 = vmul.f32 32.0, %v140
    %v142 = vsub.f32 1.0, %v141
    %v143 = vmul.f32 %v140, %v142
    %v144 = vadd.f32 %v140, %v143
    %vm145 = vweird.f32 %v140
    %v146 = vsel %vm145, %v140, %v144
    %v147 = vmul.f32 %v135, %v146
    %v148 = vmul.f32 %v139, %v146
    %v149 = vsub.f32 %v124, %v147
    %v150 = vsub.f32 %v125, %v148
    %v151 = vmul.f32 %v149, %v149
    %v152 = vmul.f32 %v150, %v150
    %v153 = vsel %vm132, %v151, 0.0
    %154 = vadd.xlane.f32.xlu0 %v153
    %v155 = vpop.xlane.xlu0 %154
    %v156 = vsel %vm136, %v152, 0.0
    %157 = vadd.xlane.f32.xlu0 %v156
    %v158 = vpop.xlane.xlu0 %157
    %v159 = vmul.f32 %v155, %v146
    %v160 = vmul.f32 %v158, %v146
    %v161 = vadd.f32 %v159, 1e-05
    %v162 = vadd.f32 %v160, 1e-05
    %v163 = vrsqrt.pop %v161
    %v164 = vmul.f32 %v163, %v161
    %v165 = vmul.f32 %v164, %v163
    %v166 = vmul.f32 0.5, %v165
    %v167 = vsub.f32 1.5, %v166
    %v168 = vmul.f32 %v163, %v167
    %vm169 = vweird.f32 %v161
    %vm170 = vweird.f32 %v163
    %vm171 = vmor %vm169, %vm170
    %v172 = vsel %vm171, %v163, %v168
    %v173 = vrsqrt.pop %v162
    %v174 = vmul.f32 %v173, %v162
    %v175 = vmul.f32 %v174, %v173
    %v176 = vmul.f32 0.5, %v175
    %v177 = vsub.f32 1.5, %v176
    %v178 = vmul.f32 %v173, %v177
    %vm179 = vweird.f32 %v162
    %vm180 = vweird.f32 %v173
    %vm181 = vmor %vm179, %vm180
    %v182 = vsel %vm181, %v173, %v178
    %v183 = vmul.f32 %v149, %v172
    %v184 = vmul.f32 %v150, %v182
    %v185 = vperm.slane %v130, 0
    %v186 = vmul.f32 %v183, %v185
    %v187 = vmul.f32 %v184, %v185
    %v188 = vperm.slane %v131, 0
    %v189 = vadd.f32 %v186, %v188
    %v190 = vadd.f32 %v187, %v188
    %v191 = vld [vmem:[#allocation10 + $0x10] sm:$0x1]
    %v192 = vld [vmem:[#allocation10 + $0x18] sm:$0x1]
    %v193 = vsel %vm132, %v126, 0.0
    %194 = vadd.xlane.f32.xlu0 %v193
    %v195 = vpop.xlane.xlu0 %194
    %v196 = vsel %vm136, %v127, 0.0
    %197 = vadd.xlane.f32.xlu0 %v196
    %v198 = vpop.xlane.xlu0 %197
    %v199 = vmul.f32 %v195, %v146
    %v200 = vmul.f32 %v198, %v146
    %v201 = vsub.f32 %v126, %v199
    %v202 = vsub.f32 %v127, %v200
    %v203 = vmul.f32 %v201, %v201
    %v204 = vmul.f32 %v202, %v202
    %v205 = vsel %vm132, %v203, 0.0
    %206 = vadd.xlane.f32.xlu0 %v205
    %v207 = vpop.xlane.xlu0 %206
    %v208 = vsel %vm136, %v204, 0.0
    %209 = vadd.xlane.f32.xlu0 %v208
    %v210 = vpop.xlane.xlu0 %209
    %v211 = vmul.f32 %v207, %v146
    %v212 = vmul.f32 %v210, %v146
    %v213 = vadd.f32 %v211, 1e-05
    %v214 = vadd.f32 %v212, 1e-05
    %v215 = vrsqrt.pop %v213
    %v216 = vmul.f32 %v215, %v213
    %v217 = vmul.f32 %v216, %v215
    %v218 = vmul.f32 0.5, %v217
    %v219 = vsub.f32 1.5, %v218
    %v220 = vmul.f32 %v215, %v219
    %vm221 = vweird.f32 %v213
    %vm222 = vweird.f32 %v215
    %vm223 = vmor %vm221, %vm222
    %v224 = vsel %vm223, %v215, %v220
    %v225 = vrsqrt.pop %v214
    %v226 = vmul.f32 %v225, %v214
    %v227 = vmul.f32 %v226, %v225
    %v228 = vmul.f32 0.5, %v227
    %v229 = vsub.f32 1.5, %v228
    %v230 = vmul.f32 %v225, %v229
    %vm231 = vweird.f32 %v214
    %vm232 = vweird.f32 %v225
    %vm233 = vmor %vm231, %vm232
    %v234 = vsel %vm233, %v225, %v230
    %v235 = vmul.f32 %v201, %v224
    %v236 = vmul.f32 %v202, %v234
    %v237 = vperm.slane %v191, 0
    %v238 = vmul.f32 %v235, %v237
    %v239 = vmul.f32 %v236, %v237
    %v240 = vperm.slane %v192, 0
    %v241 = vadd.f32 %v238, %v240
    %v242 = vadd.f32 %v239, %v240
    %v243 = vld [vmem:[#allocation10 + $0x20] sm:$0xff]
    %v244 = vld [vmem:[#allocation10 + $0x28] sm:$0xff]
    %v245 = vld [vmem:[#allocation10 + $0x30] sm:$0xff]
    %v246 = vld [vmem:[#allocation10 + $0x38] sm:$0xff]
    %v248 = vsel %vm132, %v189, 0
    %v251 = vsel %vm132, %v190, 0
    %253 = vmatpush.msra.mxu0 0.0
    %254 = vmatpush.msra.mxu0 0.0
    %255 = vmatpush.msra.mxu0 0.0
    %256 = vmatpush.msra.mxu0 0.0
    %257 = vmatpush.msra.mxu0 0.0
    %258 = vmatpush.msra.mxu0 0.0
    %259 = vmatpush.msra.mxu0 0.0
    %260 = vmatpush.msra.mxu0 0.0
    %261 = vmatpush.msra.mxu0 0.0
    %262 = vmatpush.msra.mxu0 0.0
    %263 = vmatpush.msra.mxu0 0.0
    %264 = vmatpush.msra.mxu0 0.0
    %265 = vmatpush.msra.mxu0 %v246
    %266 = vmatpush.msra.mxu0 %v245
    %267 = vmatpush.msra.mxu0 %v244
    %268 = vmatpush.msra.mxu0 %v243
    %269 = vmatmul.f32.gmra.mxu0 %v248
    %v270 = vpop.f32.mrf.mxu0
    %v271 = vadd.f32 0.0, %v270
    %272 = vmatmul.f32.gmra.mxu0 %v251
    %v273 = vpop.f32.mrf.mxu0
    %v274 = vadd.f32 0.0, %v273
    %275 = vdwg.mxu0
    %v276 = vld [vmem:[#allocation10 + $0x40] sm:$0xff]
    %v277 = vld [vmem:[#allocation10 + $0x48] sm:$0xf]
    %v278 = vmul.f32 %v271, %v276
    %v279 = vmul.f32 %v274, %v277
    %v280 = vld [vmem:[#allocation10 + $0xd0] sm:$0xff]
    %v281 = vld [vmem:[#allocation10 + $0xd8] sm:$0xff]
    %v282 = vld [vmem:[#allocation10 + $0xe0] sm:$0xff]
    %v283 = vld [vmem:[#allocation10 + $0xe8] sm:$0xff]
    %v285 = vsel %vm132, %v241, 0
    %v288 = vsel %vm132, %v242, 0
    %290 = vmatpush.msra.mxu0 0.0
    %291 = vmatpush.msra.mxu0 0.0
    %292 = vmatpush.msra.mxu0 0.0
    %293 = vmatpush.msra.mxu0 0.0
    %294 = vmatpush.msra.mxu0 0.0
    %295 = vmatpush.msra.mxu0 0.0
    %296 = vmatpush.msra.mxu0 0.0
    %297 = vmatpush.msra.mxu0 0.0
    %298 = vmatpush.msra.mxu0 0.0
    %299 = vmatpush.msra.mxu0 0.0
    %300 = vmatpush.msra.mxu0 0.0
    %301 = vmatpush.msra.mxu0 0.0
    %302 = vmatpush.msra.mxu0 %v283
    %303 = vmatpush.msra.mxu0 %v282
    %304 = vmatpush.msra.mxu0 %v281
    %305 = vmatpush.msra.mxu0 %v280
    %306 = vmatmul.f32.gmra.mxu0 %v285
    %v307 = vpop.f32.mrf.mxu0
    %v308 = vadd.f32 0.0, %v307
    %309 = vmatmul.f32.gmra.mxu0 %v288
    %v310 = vpop.f32.mrf.mxu0
    %v311 = vadd.f32 0.0, %v310
    %312 = vdwg.mxu0
    %v313 = vld [vmem:[#allocation10 + $0xf0] sm:$0xff]
    %v314 = vld [vmem:[#allocation10 + $0xf8] sm:$0xf]
    %v315 = vmul.f32 %v308, %v313
    %v316 = vmul.f32 %v311, %v314
    %v317 = vld [vmem:[#allocation10 + $0x50] sm:$0xff]
    %v318 = vld [vmem:[#allocation10 + $0x58] sm:$0xff]
    %v319 = vld [vmem:[#allocation10 + $0x60] sm:$0xff]
    %v320 = vld [vmem:[#allocation10 + $0x68] sm:$0xff]
    %v321 = vld [vmem:[#allocation10 + $0x70] sm:$0xff]
    %v322 = vld [vmem:[#allocation10 + $0x78] sm:$0xff]
    %v323 = vld [vmem:[#allocation10 + $0x80] sm:$0xff]
    %v324 = vld [vmem:[#allocation10 + $0x88] sm:$0xff]
    %v325 = vld [vmem:[#allocation10 + $0x90] sm:$0xff]
    %v326 = vld [vmem:[#allocation10 + $0x98] sm:$0xff]
    %v327 = vld [vmem:[#allocation10 + $0xa0] sm:$0xff]
    %v328 = vld [vmem:[#allocation10 + $0xa8] sm:$0xff]
    %v329 = vld [vmem:[#allocation10 + $0xb0] sm:$0xff]
    %v330 = vld [vmem:[#allocation10 + $0xb8] sm:$0xff]
    %v331 = vld [vmem:[#allocation10 + $0xc0] sm:$0xff]
    %v332 = vld [vmem:[#allocation10 + $0xc8] sm:$0xff]
    %333 = vmatpush.msra.mxu0 %v332
    %334 = vmatpush.msra.mxu0 %v331
    %335 = vmatpush.msra.mxu0 %v330
    %336 = vmatpush.msra.mxu0 %v329
    %337 = vmatpush.msra.mxu0 %v328
    %338 = vmatpush.msra.mxu0 %v327
    %339 = vmatpush.msra.mxu0 %v326
    %340 = vmatpush.msra.mxu0 %v325
    %341 = vmatpush.msra.mxu0 %v324
    %342 = vmatpush.msra.mxu0 %v323
    %343 = vmatpush.msra.mxu0 %v322
    %344 = vmatpush.msra.mxu0 %v321
    %345 = vmatpush.msra.mxu0 %v320
    %346 = vmatpush.msra.mxu0 %v319
    %347 = vmatpush.msra.mxu0 %v318
    %348 = vmatpush.msra.mxu0 %v317
    %349 = vmatmul.f32.gmra.mxu0 %v278
    %v350 = vpop.f32.mrf.mxu0
    %v351 = vadd.f32 0.0, %v350
    %352 = vmatmul.f32.gmra.mxu0 %v279
    %v353 = vpop.f32.mrf.mxu0
    %v354 = vadd.f32 0.0, %v353
    %355 = vdwg.mxu0
    %v356 = vmul.f32 %v351, 0.35355338
    %v357 = vmul.f32 %v354, 0.35355338
    %v358 = vld [vmem:[#allocation10 + $0x100] sm:$0xff]
    %v359 = vld [vmem:[#allocation10 + $0x108] sm:$0xff]
    %v360 = vld [vmem:[#allocation10 + $0x110] sm:$0xff]
    %v361 = vld [vmem:[#allocation10 + $0x118] sm:$0xff]
    %v362 = vld [vmem:[#allocation10 + $0x120] sm:$0xff]
    %v363 = vld [vmem:[#allocation10 + $0x128] sm:$0xff]
    %v364 = vld [vmem:[#allocation10 + $0x130] sm:$0xff]
    %v365 = vld [vmem:[#allocation10 + $0x138] sm:$0xff]
    %vm366 = vcmask 523264
    %v368 = vsel %vm366, %v315, 0
    %v371 = vsel %vm366, %v316, 0
    %373 = vmatpush.msra.mxu0 0.0
    %374 = vmatpush.msra.mxu0 0.0
    %375 = vmatpush.msra.mxu0 0.0
    %376 = vmatpush.msra.mxu0 0.0
    %377 = vmatpush.msra.mxu0 0.0
    %378 = vmatpush.msra.mxu0 0.0
    %379 = vmatpush.msra.mxu0 0.0
    %380 = vmatpush.msra.mxu0 0.0
    %381 = vmatpush.msra.mxu0 %v365
    %382 = vmatpush.msra.mxu0 %v364
    %383 = vmatpush.msra.mxu0 %v363
    %384 = vmatpush.msra.mxu0 %v362
    %385 = vmatpush.msra.mxu0 %v361
    %386 = vmatpush.msra.mxu0 %v360
    %387 = vmatpush.msra.mxu0 %v359
    %388 = vmatpush.msra.mxu0 %v358
    %389 = vmatmul.f32.gmra.mxu0 %v368
    %v390 = vpop.f32.mrf.mxu0
    %v391 = vadd.f32 0.0, %v390
    %392 = vmatmul.f32.gmra.mxu0 %v371
    %v393 = vpop.f32.mrf.mxu0
    %v394 = vadd.f32 0.0, %v393
    %395 = vdwg.mxu0
    %v396 = vld [vmem:[#allocation10 + $0x140] sm:$0xff]
    %v397 = vld [vmem:[#allocation10 + $0x148] sm:$0xff]
    %v398 = vld [vmem:[#allocation10 + $0x150] sm:$0xff]
    %v399 = vld [vmem:[#allocation10 + $0x158] sm:$0xff]
    %v400 = vld [vmem:[#allocation10 + $0x160] sm:$0xff]
    %v401 = vld [vmem:[#allocation10 + $0x168] sm:$0xff]
    %v402 = vld [vmem:[#allocation10 + $0x170] sm:$0xff]
    %v403 = vld [vmem:[#allocation10 + $0x178] sm:$0xff]
    %404 = vmatpush.msra.mxu0 0.0
    %405 = vmatpush.msra.mxu0 0.0
    %406 = vmatpush.msra.mxu0 0.0
    %407 = vmatpush.msra.mxu0 0.0
    %408 = vmatpush.msra.mxu0 0.0
    %409 = vmatpush.msra.mxu0 0.0
    %410 = vmatpush.msra.mxu0 0.0
    %411 = vmatpush.msra.mxu0 0.0
    %412 = vmatpush.msra.mxu0 %v403
    %413 = vmatpush.msra.mxu0 %v402
    %414 = vmatpush.msra.mxu0 %v401
    %415 = vmatpush.msra.mxu0 %v400
    %416 = vmatpush.msra.mxu0 %v399
    %417 = vmatpush.msra.mxu0 %v398
    %418 = vmatpush.msra.mxu0 %v397
    %419 = vmatpush.msra.mxu0 %v396
    %420 = vmatmul.f32.gmra.mxu0 %v368
    %v421 = vpop.f32.mrf.mxu0
    %v422 = vadd.f32 0.0, %v421
    %423 = vmatmul.f32.gmra.mxu0 %v371
    %v424 = vpop.f32.mrf.mxu0
    %v425 = vadd.f32 0.0, %v424
    %426 = vdwg.mxu0
    %v427 = vld [vmem:[#allocation10 + $0x1c8] sm:$0xff]
    %v428 = vld [vmem:[#allocation10 + $0x1d0] sm:$0xff]
    %v429 = vld [vmem:[#allocation10 + $0x1d8] sm:$0xff]
    %v430 = vld [vmem:[#allocation10 + $0x1e0] sm:$0xff]
    %v431 = vld [vmem:[#allocation10 + $0x1e8] sm:$0xff]
    %v432 = vld [vmem:[#allocation10 + $0x1f0] sm:$0xff]
    %v433 = vld [vmem:[#allocation10 + $0x1f8] sm:$0xff]
    %v434 = vld [vmem:[#allocation10 + $0x200] sm:$0xff]
    %v435 = vld [vmem:[#allocation10 + $0x208] sm:$0xff]
    %v436 = vld [vmem:[#allocation10 + $0x210] sm:$0xff]
    %v437 = vld [vmem:[#allocation10 + $0x218] sm:$0xff]
    %v438 = vld [vmem:[#allocation10 + $0x220] sm:$0xff]
    %vm439 = vcmask 97280
    %v441 = vsel %vm439, %v427, 0
    %v444 = vsel %vm439, %v428, 0
    %v447 = vsel %vm439, %v429, 0
    %v450 = vsel %vm439, %v430, 0
    %v453 = vsel %vm439, %v431, 0
    %v456 = vsel %vm439, %v432, 0
    %vm458 = vcmask 1043456
    %v460 = vsel %vm458, %v394, 0
    %462 = vmatpush.msra.mxu0 0.0
    %463 = vmatpush.msra.mxu0 0.0
    %464 = vmatpush.msra.mxu0 0.0
    %465 = vmatpush.msra.mxu0 0.0
    %466 = vmatpush.msra.mxu0 0.0
    %467 = vmatpush.msra.mxu0 0.0
    %468 = vmatpush.msra.mxu0 0.0
    %469 = vmatpush.msra.mxu0 0.0
    %470 = vmatpush.msra.mxu0 0.0
    %471 = vmatpush.msra.mxu0 0.0
    %472 = vmatpush.msra.mxu0 0.0
    %473 = vmatpush.msra.mxu0 0.0
    %474 = vmatpush.msra.mxu0 0.0
    %475 = vmatpush.msra.mxu0 0.0
    %476 = vmatpush.msra.mxu0 %v460
    %477 = vmatpush.msra.mxu0 %v391
    %478 = vmatmul.f32.gmra.mxu0 %v441
    %v479 = vpop.f32.mrf.mxu0
    %v480 = vadd.f32 0.0, %v479
    %481 = vmatmul.f32.gmra.mxu0 %v444
    %v482 = vpop.f32.mrf.mxu0
    %v483 = vadd.f32 0.0, %v482
    %484 = vmatmul.f32.gmra.mxu0 %v447
    %v485 = vpop.f32.mrf.mxu0
    %v486 = vadd.f32 0.0, %v485
    %487 = vmatmul.f32.gmra.mxu0 %v450
    %v488 = vpop.f32.mrf.mxu0
    %v489 = vadd.f32 0.0, %v488
    %490 = vmatmul.f32.gmra.mxu0 %v453
    %v491 = vpop.f32.mrf.mxu0
    %v492 = vadd.f32 0.0, %v491
    %493 = vmatmul.f32.gmra.mxu0 %v456
    %v494 = vpop.f32.mrf.mxu0
    %v495 = vadd.f32 0.0, %v494
    %496 = vdwg.mxu0
    %v497 = vmul.f32 %v480, %v433
    %v498 = vmul.f32 %v483, %v434
    %v499 = vmul.f32 %v486, %v435
    %v500 = vmul.f32 %v489, %v436
    %v501 = vmul.f32 %v492, %v437
    %v502 = vmul.f32 %v495, %v438
    %v504 = vsel %vm458, %v425, 0
    %506 = vmatpush.msra.mxu0 0.0
    %507 = vmatpush.msra.mxu0 0.0
    %508 = vmatpush.msra.mxu0 0.0
    %509 = vmatpush.msra.mxu0 0.0
    %510 = vmatpush.msra.mxu0 0.0
    %511 = vmatpush.msra.mxu0 0.0
    %512 = vmatpush.msra.mxu0 0.0
    %513 = vmatpush.msra.mxu0 0.0
    %514 = vmatpush.msra.mxu0 0.0
    %515 = vmatpush.msra.mxu0 0.0
    %516 = vmatpush.msra.mxu0 0.0
    %517 = vmatpush.msra.mxu0 0.0
    %518 = vmatpush.msra.mxu0 0.0
    %519 = vmatpush.msra.mxu0 0.0
    %520 = vmatpush.msra.mxu0 %v504
    %521 = vmatpush.msra.mxu0 %v422
    %522 = vmatmul.f32.gmra.mxu0 %v441
    %v523 = vpop.f32.mrf.mxu0
    %v524 = vadd.f32 0.0, %v523
    %525 = vmatmul.f32.gmra.mxu0 %v444
    %v526 = vpop.f32.mrf.mxu0
    %v527 = vadd.f32 0.0, %v526
    %528 = vmatmul.f32.gmra.mxu0 %v447
    %v529 = vpop.f32.mrf.mxu0
    %v530 = vadd.f32 0.0, %v529
    %531 = vmatmul.f32.gmra.mxu0 %v450
    %v532 = vpop.f32.mrf.mxu0
    %v533 = vadd.f32 0.0, %v532
    %534 = vmatmul.f32.gmra.mxu0 %v453
    %v535 = vpop.f32.mrf.mxu0
    %v536 = vadd.f32 0.0, %v535
    %537 = vmatmul.f32.gmra.mxu0 %v456
    %v538 = vpop.f32.mrf.mxu0
    %v539 = vadd.f32 0.0, %v538
    %540 = vdwg.mxu0
    %v541 = vmul.f32 %v524, %v433
    %v542 = vmul.f32 %v527, %v434
    %v543 = vmul.f32 %v530, %v435
    %v544 = vmul.f32 %v533, %v436
    %v545 = vmul.f32 %v536, %v437
    %v546 = vmul.f32 %v539, %v438
    %v548 = vsel %vm132, %v356, 0
    %v551 = vsel %vm132, %v357, 0
    %v554 = vsel %vm132, %v497, 0
    %v557 = vsel %vm132, %v498, 0
    %v560 = vsel %vm132, %v499, 0
    %v563 = vsel %vm132, %v500, 0
    %v566 = vsel %vm132, %v501, 0
    %v569 = vsel %vm132, %v502, 0
    %571 = vmatpush.xpose.msra.mxu0 0.0
    %572 = vmatpush.xpose.msra.mxu0 0.0
    %573 = vmatpush.xpose.msra.mxu0 0.0
    %574 = vmatpush.xpose.msra.mxu0 0.0
    %575 = vmatpush.xpose.msra.mxu0 0.0
    %576 = vmatpush.xpose.msra.mxu0 0.0
    %577 = vmatpush.xpose.msra.mxu0 0.0
    %578 = vmatpush.xpose.msra.mxu0 0.0
    %579 = vmatpush.xpose.msra.mxu0 0.0
    %580 = vmatpush.xpose.msra.mxu0 0.0
    %581 = vmatpush.xpose.msra.mxu0 %v569
    %582 = vmatpush.xpose.msra.mxu0 %v566
    %583 = vmatpush.xpose.msra.mxu0 %v563
    %584 = vmatpush.xpose.msra.mxu0 %v560
    %585 = vmatpush.xpose.msra.mxu0 %v557
    %586 = vmatpush.xpose.msra.mxu0 %v554
    %587 = vmatmul.f32.gmra.mxu0 %v548
    %v588 = vpop.f32.mrf.mxu0
    %v589 = vadd.f32 %v128, %v588
    %590 = vmatmul.f32.gmra.mxu0 %v551
    %v591 = vpop.f32.mrf.mxu0
    %v592 = vadd.f32 %v129, %v591
    %593 = vdwg.mxu0
    %vm594 = vcmp.lt.f32.partialorder %v128, 0.0
    %vm595 = vcmp.lt.f32.partialorder %v129, 0.0
    %v596 = vsel %vm594, -inf, %v589
    %v597 = vsel %vm595, -inf, %v592
    %v598 = vld [vmem:[#allocation10 + $0x228] sm:$0xf]
    %vm599 = vcmp.gt.f32.partialorder %v598, 0.0
    %v600 = vsel %vm599, 1, 0
    %v601 = vperm.slane %v600, 0
    %vm602 = vcmp.eq.s32.totalorder %v601, 1
    %v603 = vsel %vm602, %v589, -inf
    %v604 = vsel %vm602, %v592, -inf
    %vm605 = vcmask 392192
    %v606 = vsel %vm605, %v603, -inf
    %607 = vmax.xlane.f32.xlu0 %v606
    %v608 = vpop.xlane.xlu0 %607
    %vm609 = vcmask 388096
    %v610 = vsel %vm609, %v604, -inf
    %611 = vmax.xlane.f32.xlu0 %v610
    %v612 = vpop.xlane.xlu0 %611
    %v613 = vperm.slane %v598, 0
    %v614 = vmul.f32 %v608, %v613
    %v615 = vmul.f32 %v612, %v613
    %v616 = vadd.f32 %v614, 0.0
    %v617 = vadd.f32 %v615, 0.0
    %v618 = vperm.slane %v600, 1
    %vm619 = vcmp.eq.s32.totalorder %v618, 1
    %v620 = vsel %vm619, %v589, -inf
    %v621 = vsel %vm619, %v592, -inf
    %v622 = vsel %vm605, %v620, -inf
    %623 = vmax.xlane.f32.xlu0 %v622
    %v624 = vpop.xlane.xlu0 %623
    %v625 = vsel %vm609, %v621, -inf
    %626 = vmax.xlane.f32.xlu0 %v625
    %v627 = vpop.xlane.xlu0 %626
    %v628 = vperm.slane %v598, 1
    %v629 = vmul.f32 %v624, %v628
    %v630 = vmul.f32 %v627, %v628
    %v631 = vadd.f32 %v616, %v629
    %v632 = vadd.f32 %v617, %v630
    %v633 = vperm.slane %v600, 2
    %vm634 = vcmp.eq.s32.totalorder %v633, 1
    %v635 = vsel %vm634, %v589, -inf
    %v636 = vsel %vm634, %v592, -inf
    %v637 = vsel %vm605, %v635, -inf
    %638 = vmax.xlane.f32.xlu0 %v637
    %v639 = vpop.xlane.xlu0 %638
    %v640 = vsel %vm609, %v636, -inf
    %641 = vmax.xlane.f32.xlu0 %v640
    %v642 = vpop.xlane.xlu0 %641
    %v643 = vperm.slane %v598, 2
    %v644 = vmul.f32 %v639, %v643
    %v645 = vmul.f32 %v642, %v643
    %v646 = vadd.f32 %v631, %v644
    %v647 = vadd.f32 %v632, %v645
    %v648 = vperm.slane %v600, 3
    %vm649 = vcmp.eq.s32.totalorder %v648, 1
    %v650 = vsel %vm649, %v589, -inf
    %v651 = vsel %vm649, %v592, -inf
    %v652 = vsel %vm605, %v650, -inf
    %653 = vmax.xlane.f32.xlu0 %v652
    %v654 = vpop.xlane.xlu0 %653
    %v655 = vsel %vm609, %v651, -inf
    %656 = vmax.xlane.f32.xlu0 %v655
    %v657 = vpop.xlane.xlu0 %656
    %v658 = vperm.slane %v598, 3
    %v659 = vmul.f32 %v654, %v658
    %v660 = vmul.f32 %v657, %v658
    %v661 = vadd.f32 %v646, %v659
    %v662 = vadd.f32 %v647, %v660
    %v663 = vsub.f32 %v589, %v661
    %v664 = vsub.f32 %v592, %v662
    %v665 = vmul.f32 %v663, 1.442695
    %v666 = vpow.pop %v665
    %v667 = vmul.f32 %v664, 1.442695
    %v668 = vpow.pop %v667
    %v669 = vmul.f32 %v666, %v613
    %v670 = vmul.f32 %v668, %v613
    %v671 = vsel %vm605, %v669, 0.0
    %672 = vadd.xlane.f32.xlu0 %v671
    %v673 = vpop.xlane.xlu0 %672
    %v674 = vsel %vm609, %v670, 0.0
    %675 = vadd.xlane.f32.xlu0 %v674
    %v676 = vpop.xlane.xlu0 %675
    %v677 = vrcp.pop %v673
    %v678 = vrcp.pop %v676
    %v679 = vmul.f32 %v677, %v613
    %v680 = vmul.f32 %v678, %v613
    %v681 = vadd.f32 %v679, 0.0
    %v682 = vadd.f32 %v680, 0.0
    %v683 = vmul.f32 %v666, %v628
    %v684 = vmul.f32 %v668, %v628
    %v685 = vsel %vm605, %v683, 0.0
    %686 = vadd.xlane.f32.xlu0 %v685
    %v687 = vpop.xlane.xlu0 %686
    %v688 = vsel %vm609, %v684, 0.0
    %689 = vadd.xlane.f32.xlu0 %v688
    %v690 = vpop.xlane.xlu0 %689
    %v691 = vrcp.pop %v687
    %v692 = vrcp.pop %v690
    %v693 = vmul.f32 %v691, %v628
    %v694 = vmul.f32 %v692, %v628
    %v695 = vadd.f32 %v681, %v693
    %v696 = vadd.f32 %v682, %v694
    %v697 = vmul.f32 %v666, %v643
    %v698 = vmul.f32 %v668, %v643
    %v699 = vsel %vm605, %v697, 0.0
    %700 = vadd.xlane.f32.xlu0 %v699
    %v701 = vpop.xlane.xlu0 %700
    %v702 = vsel %vm609, %v698, 0.0
    %703 = vadd.xlane.f32.xlu0 %v702
    %v704 = vpop.xlane.xlu0 %703
    %v705 = vrcp.pop %v701
    %v706 = vrcp.pop %v704
    %v707 = vmul.f32 %v705, %v643
    %v708 = vmul.f32 %v706, %v643
    %v709 = vadd.f32 %v695, %v707
    %v710 = vadd.f32 %v696, %v708
    %v711 = vmul.f32 %v666, %v658
    %v712 = vmul.f32 %v668, %v658
    %v713 = vsel %vm605, %v711, 0.0
    %714 = vadd.xlane.f32.xlu0 %v713
    %v715 = vpop.xlane.xlu0 %714
    %v716 = vsel %vm609, %v712, 0.0
    %717 = vadd.xlane.f32.xlu0 %v716
    %v718 = vpop.xlane.xlu0 %717
    %v719 = vrcp.pop %v715
    %v720 = vrcp.pop %v718
    %v721 = vmul.f32 %v719, %v658
    %v722 = vmul.f32 %v720, %v658
    %v723 = vadd.f32 %v709, %v721
    %v724 = vadd.f32 %v710, %v722
    %v725 = vmul.f32 %v666, %v723
    %v726 = vmul.f32 %v668, %v724
    %v728 = vsel %vm605, %v725, 0
    %v731 = vsel %vm605, %v726, 0
    %733 = vmatpush.msra.mxu0 0.0
    %734 = vmatpush.msra.mxu0 0.0
    %735 = vmatpush.msra.mxu0 0.0
    %736 = vmatpush.msra.mxu0 0.0
    %737 = vmatpush.msra.mxu0 0.0
    %738 = vmatpush.msra.mxu0 0.0
    %739 = vmatpush.msra.mxu0 0.0
    %740 = vmatpush.msra.mxu0 0.0
    %741 = vmatpush.msra.mxu0 0.0
    %742 = vmatpush.msra.mxu0 0.0
    %743 = vmatpush.msra.mxu0 %v546
    %744 = vmatpush.msra.mxu0 %v545
    %745 = vmatpush.msra.mxu0 %v544
    %746 = vmatpush.msra.mxu0 %v543
    %747 = vmatpush.msra.mxu0 %v542
    %748 = vmatpush.msra.mxu0 %v541
    %749 = vmatmul.f32.gmra.mxu0 %v728
    %v750 = vpop.f32.mrf.mxu0
    %v751 = vadd.f32 0.0, %v750
    %752 = vmatmul.f32.gmra.mxu0 %v731
    %v753 = vpop.f32.mrf.mxu0
    %v754 = vadd.f32 0.0, %v753
    %755 = vdwg.mxu0
    %v756 = vsub.f32 0.0, %v751
    %v757 = vsub.f32 0.0, %v754
    %v758 = vmul.f32 %v756, 1.442695
    %v759 = vpow.pop %v758
    %v760 = vmul.f32 %v757, 1.442695
    %v761 = vpow.pop %v760
    %v762 = vadd.f32 %v759, 1.0
    %v763 = vadd.f32 %v761, 1.0
    %v764 = vrcp.pop %v762
    %v765 = vrcp.pop %v763
    %v766 = vmul.f32 %v751, %v764
    %v767 = vmul.f32 %v754, %v765
    %v768 = vld [vmem:[#allocation10 + $0x180] sm:$0xff]
    %v769 = vld [vmem:[#allocation10 + $0x188] sm:$0xff]
    %v770 = vld [vmem:[#allocation10 + $0x190] sm:$0xff]
    %v771 = vld [vmem:[#allocation10 + $0x198] sm:$0xff]
    %v772 = vld [vmem:[#allocation10 + $0x1a0] sm:$0xff]
    %v773 = vld [vmem:[#allocation10 + $0x1a8] sm:$0xff]
    %v774 = vld [vmem:[#allocation10 + $0x1b0] sm:$0xff]
    %v775 = vld [vmem:[#allocation10 + $0x1b8] sm:$0xff]
    %v777 = vsel %vm132, %v766, 0
    %v780 = vsel %vm132, %v767, 0
    %782 = vmatpush.msra.mxu0 0.0
    %783 = vmatpush.msra.mxu0 0.0
    %784 = vmatpush.msra.mxu0 0.0
    %785 = vmatpush.msra.mxu0 0.0
    %786 = vmatpush.msra.mxu0 0.0
    %787 = vmatpush.msra.mxu0 0.0
    %788 = vmatpush.msra.mxu0 0.0
    %789 = vmatpush.msra.mxu0 0.0
    %790 = vmatpush.msra.mxu0 0.0
    %791 = vmatpush.msra.mxu0 0.0
    %792 = vmatpush.msra.mxu0 0.0
    %793 = vmatpush.msra.mxu0 0.0
    %794 = vmatpush.msra.mxu0 %v775
    %795 = vmatpush.msra.mxu0 %v774
    %796 = vmatpush.msra.mxu0 %v773
    %797 = vmatpush.msra.mxu0 %v772
    %798 = vmatmul.f32.gmra.mxu0 %v777
    %v799 = vpop.f32.mrf.mxu0
    %v800 = vadd.f32 0.0, %v799
    %801 = vmatmul.f32.gmra.mxu0 %v780
    %v802 = vpop.f32.mrf.mxu0
    %v803 = vadd.f32 0.0, %v802
    %804 = vdwg.mxu0
    %805 = vmatpush.msra.mxu0 0.0
    %806 = vmatpush.msra.mxu0 0.0
    %807 = vmatpush.msra.mxu0 0.0
    %808 = vmatpush.msra.mxu0 0.0
    %809 = vmatpush.msra.mxu0 0.0
    %810 = vmatpush.msra.mxu0 0.0
    %811 = vmatpush.msra.mxu0 0.0
    %812 = vmatpush.msra.mxu0 0.0
    %813 = vmatpush.msra.mxu0 0.0
    %814 = vmatpush.msra.mxu0 0.0
    %815 = vmatpush.msra.mxu0 0.0
    %816 = vmatpush.msra.mxu0 0.0
    %817 = vmatpush.msra.mxu0 %v771
    %818 = vmatpush.msra.mxu0 %v770
    %819 = vmatpush.msra.mxu0 %v769
    %820 = vmatpush.msra.mxu0 %v768
    %821 = vmatmul.f32.gmra.mxu0 %v248
    %v822 = vpop.f32.mrf.mxu0
    %v823 = vadd.f32 %v800, %v822
    %824 = vmatmul.f32.gmra.mxu0 %v251
    %v825 = vpop.f32.mrf.mxu0
    %v826 = vadd.f32 %v803, %v825
    %827 = vdwg.mxu0
    %v828 = vld [vmem:[#allocation10 + $0x1c0] sm:$0x1]
    %v829 = vperm.slane %v828, 0
    %v830 = vadd.f32 %v823, %v829
    %v831 = vadd.f32 %v826, %v829
    %832 = vst.msk [vmem:[#allocation13] sm:$0xff] %vm132, %v830
    %833 = vst.msk [vmem:[#allocation13 + $0x8] sm:$0xf] %vm136, %v831
    %834 = vst.msk [vmem:[#allocation16] sm:$0xff] %vm605, %v596
    %835 = vst.msk [vmem:[#allocation16 + $0x8] sm:$0xf] %vm609, %v597
    %v836 = vld [vmem:[#allocation8] sm:$0xff]
    %v837 = vld [vmem:[#allocation8 + $0x8] sm:$0xf]
    %v838 = vld [vmem:[#allocation11] sm:$0x1]
    %v839 = vld [vmem:[#allocation11 + $0x8] sm:$0x1]
    %v840 = vperm.slane %v838, 0
    %v841 = vmul.f32 %v235, %v840
    %v842 = vmul.f32 %v236, %v840
    %v843 = vperm.slane %v839, 0
    %v844 = vadd.f32 %v841, %v843
    %v845 = vadd.f32 %v842, %v843
    %v846 = vld [vmem:[#allocation11 + $0x10] sm:$0x1]
    %v847 = vld [vmem:[#allocation11 + $0x18] sm:$0x1]
    %v848 = vsel %vm132, %v830, 0.0
    %849 = vadd.xlane.f32.xlu0 %v848
    %v850 = vpop.xlane.xlu0 %849
    %v851 = vsel %vm136, %v831, 0.0
    %852 = vadd.xlane.f32.xlu0 %v851
    %v853 = vpop.xlane.xlu0 %852
    %v854 = vmul.f32 %v850, %v146
    %v855 = vmul.f32 %v853, %v146
    %v856 = vsub.f32 %v830, %v854
    %v857 = vsub.f32 %v831, %v855
    %v858 = vmul.f32 %v856, %v856
    %v859 = vmul.f32 %v857, %v857
    %v860 = vsel %vm132, %v858, 0.0
    %861 = vadd.xlane.f32.xlu0 %v860
    %v862 = vpop.xlane.xlu0 %861
    %v863 = vsel %vm136, %v859, 0.0
    %864 = vadd.xlane.f32.xlu0 %v863
    %v865 = vpop.xlane.xlu0 %864
    %v866 = vmul.f32 %v862, %v146
    %v867 = vmul.f32 %v865, %v146
    %v868 = vadd.f32 %v866, 1e-05
    %v869 = vadd.f32 %v867, 1e-05
    %v870 = vrsqrt.pop %v868
    %v871 = vmul.f32 %v870, %v868
    %v872 = vmul.f32 %v871, %v870
    %v873 = vmul.f32 0.5, %v872
    %v874 = vsub.f32 1.5, %v873
    %v875 = vmul.f32 %v870, %v874
    %vm876 = vweird.f32 %v868
    %vm877 = vweird.f32 %v870
    %vm878 = vmor %vm876, %vm877
    %v879 = vsel %vm878, %v870, %v875
    %v880 = vrsqrt.pop %v869
    %v881 = vmul.f32 %v880, %v869
    %v882 = vmul.f32 %v881, %v880
    %v883 = vmul.f32 0.5, %v882
    %v884 = vsub.f32 1.5, %v883
    %v885 = vmul.f32 %v880, %v884
    %vm886 = vweird.f32 %v869
    %vm887 = vweird.f32 %v880
    %vm888 = vmor %vm886, %vm887
    %v889 = vsel %vm888, %v880, %v885
    %v890 = vmul.f32 %v856, %v879
    %v891 = vmul.f32 %v857, %v889
    %v892 = vperm.slane %v846, 0
    %v893 = vmul.f32 %v890, %v892
    %v894 = vmul.f32 %v891, %v892
    %v895 = vperm.slane %v847, 0
    %v896 = vadd.f32 %v893, %v895
    %v897 = vadd.f32 %v894, %v895
    %v898 = vld [vmem:[#allocation11 + $0x20] sm:$0xff]
    %v899 = vld [vmem:[#allocation11 + $0x28] sm:$0xff]
    %v900 = vld [vmem:[#allocation11 + $0x30] sm:$0xff]
    %v901 = vld [vmem:[#allocation11 + $0x38] sm:$0xff]
    %v903 = vsel %vm132, %v844, 0
    %v906 = vsel %vm132, %v845, 0
    %908 = vmatpush.msra.mxu0 0.0
    %909 = vmatpush.msra.mxu0 0.0
    %910 = vmatpush.msra.mxu0 0.0
    %911 = vmatpush.msra.mxu0 0.0
    %912 = vmatpush.msra.mxu0 0.0
    %913 = vmatpush.msra.mxu0 0.0
    %914 = vmatpush.msra.mxu0 0.0
    %915 = vmatpush.msra.mxu0 0.0
    %916 = vmatpush.msra.mxu0 0.0
    %917 = vmatpush.msra.mxu0 0.0
    %918 = vmatpush.msra.mxu0 0.0
    %919 = vmatpush.msra.mxu0 0.0
    %920 = vmatpush.msra.mxu0 %v901
    %921 = vmatpush.msra.mxu0 %v900
    %922 = vmatpush.msra.mxu0 %v899
    %923 = vmatpush.msra.mxu0 %v898
    %924 = vmatmul.f32.gmra.mxu0 %v903
    %v925 = vpop.f32.mrf.mxu0
    %v926 = vadd.f32 0.0, %v925
    %927 = vmatmul.f32.gmra.mxu0 %v906
    %v928 = vpop.f32.mrf.mxu0
    %v929 = vadd.f32 0.0, %v928
    %930 = vdwg.mxu0
    %v931 = vld [vmem:[#allocation11 + $0x40] sm:$0xff]
    %v932 = vld [vmem:[#allocation11 + $0x48] sm:$0xf]
    %v933 = vmul.f32 %v926, %v931
    %v934 = vmul.f32 %v929, %v932
    %v935 = vld [vmem:[#allocation11 + $0x90] sm:$0xff]
    %v936 = vld [vmem:[#allocation11 + $0x98] sm:$0xff]
    %v937 = vld [vmem:[#allocation11 + $0xa0] sm:$0xff]
    %v938 = vld [vmem:[#allocation11 + $0xa8] sm:$0xff]
    %v940 = vsel %vm132, %v896, 0
    %v943 = vsel %vm132, %v897, 0
    %945 = vmatpush.msra.mxu0 0.0
    %946 = vmatpush.msra.mxu0 0.0
    %947 = vmatpush.msra.mxu0 0.0
    %948 = vmatpush.msra.mxu0 0.0
    %949 = vmatpush.msra.mxu0 0.0
    %950 = vmatpush.msra.mxu0 0.0
    %951 = vmatpush.msra.mxu0 0.0
    %952 = vmatpush.msra.mxu0 0.0
    %953 = vmatpush.msra.mxu0 0.0
    %954 = vmatpush.msra.mxu0 0.0
    %955 = vmatpush.msra.mxu0 0.0
    %956 = vmatpush.msra.mxu0 0.0
    %957 = vmatpush.msra.mxu0 %v938
    %958 = vmatpush.msra.mxu0 %v937
    %959 = vmatpush.msra.mxu0 %v936
    %960 = vmatpush.msra.mxu0 %v935
    %961 = vmatmul.f32.gmra.mxu0 %v940
    %v962 = vpop.f32.mrf.mxu0
    %v963 = vadd.f32 0.0, %v962
    %964 = vmatmul.f32.gmra.mxu0 %v943
    %v965 = vpop.f32.mrf.mxu0
    %v966 = vadd.f32 0.0, %v965
    %967 = vdwg.mxu0
    %v968 = vld [vmem:[#allocation11 + $0xb0] sm:$0xff]
    %v969 = vld [vmem:[#allocation11 + $0xb8] sm:$0xf]
    %v970 = vmul.f32 %v963, %v968
    %v971 = vmul.f32 %v966, %v969
    %v972 = vld [vmem:[#allocation11 + $0x50] sm:$0xff]
    %v973 = vld [vmem:[#allocation11 + $0x58] sm:$0xff]
    %v974 = vld [vmem:[#allocation11 + $0x60] sm:$0xff]
    %v975 = vld [vmem:[#allocation11 + $0x68] sm:$0xff]
    %v976 = vld [vmem:[#allocation11 + $0x70] sm:$0xff]
    %v977 = vld [vmem:[#allocation11 + $0x78] sm:$0xff]
    %v978 = vld [vmem:[#allocation11 + $0x80] sm:$0xff]
    %v979 = vld [vmem:[#allocation11 + $0x88] sm:$0xff]
    %v981 = vsel %vm366, %v933, 0
    %v984 = vsel %vm366, %v934, 0
    %986 = vmatpush.msra.mxu0 0.0
    %987 = vmatpush.msra.mxu0 0.0
    %988 = vmatpush.msra.mxu0 0.0
    %989 = vmatpush.msra.mxu0 0.0
    %990 = vmatpush.msra.mxu0 0.0
    %991 = vmatpush.msra.mxu0 0.0
    %992 = vmatpush.msra.mxu0 0.0
    %993 = vmatpush.msra.mxu0 0.0
    %994 = vmatpush.msra.mxu0 %v979
    %995 = vmatpush.msra.mxu0 %v978
    %996 = vmatpush.msra.mxu0 %v977
    %997 = vmatpush.msra.mxu0 %v976
    %998 = vmatpush.msra.mxu0 %v975
    %999 = vmatpush.msra.mxu0 %v974
    %1000 = vmatpush.msra.mxu0 %v973
    %1001 = vmatpush.msra.mxu0 %v972
    %1002 = vmatmul.f32.gmra.mxu0 %v981
    %v1003 = vpop.f32.mrf.mxu0
    %v1004 = vadd.f32 0.0, %v1003
    %1005 = vmatmul.f32.gmra.mxu0 %v984
    %v1006 = vpop.f32.mrf.mxu0
    %v1007 = vadd.f32 0.0, %v1006
    %1008 = vdwg.mxu0
    %v1009 = vmul.f32 %v1004, 0.35355338
    %v1010 = vmul.f32 %v1007, 0.35355338
    %v1011 = vld [vmem:[#allocation11 + $0xc0] sm:$0xff]
    %v1012 = vld [vmem:[#allocation11 + $0xc8] sm:$0xff]
    %v1013 = vld [vmem:[#allocation11 + $0xd0] sm:$0xff]
    %v1014 = vld [vmem:[#allocation11 + $0xd8] sm:$0xff]
    %v1015 = vld [vmem:[#allocation11 + $0xe0] sm:$0xff]
    %v1016 = vld [vmem:[#allocation11 + $0xe8] sm:$0xff]
    %v1017 = vld [vmem:[#allocation11 + $0xf0] sm:$0xff]
    %v1018 = vld [vmem:[#allocation11 + $0xf8] sm:$0xff]
    %v1019 = vld [vmem:[#allocation11 + $0x100] sm:$0xff]
    %v1020 = vld [vmem:[#allocation11 + $0x108] sm:$0xff]
    %v1021 = vld [vmem:[#allocation11 + $0x110] sm:$0xff]
    %v1022 = vld [vmem:[#allocation11 + $0x118] sm:$0xff]
    %v1023 = vld [vmem:[#allocation11 + $0x120] sm:$0xff]
    %v1024 = vld [vmem:[#allocation11 + $0x128] sm:$0xff]
    %v1025 = vld [vmem:[#allocation11 + $0x130] sm:$0xff]
    %v1026 = vld [vmem:[#allocation11 + $0x138] sm:$0xff]
    %1027 = vmatpush.msra.mxu0 %v1026
    %1028 = vmatpush.msra.mxu0 %v1025
    %1029 = vmatpush.msra.mxu0 %v1024
    %1030 = vmatpush.msra.mxu0 %v1023
    %1031 = vmatpush.msra.mxu0 %v1022
    %1032 = vmatpush.msra.mxu0 %v1021
    %1033 = vmatpush.msra.mxu0 %v1020
    %1034 = vmatpush.msra.mxu0 %v1019
    %1035 = vmatpush.msra.mxu0 %v1018
    %1036 = vmatpush.msra.mxu0 %v1017
    %1037 = vmatpush.msra.mxu0 %v1016
    %1038 = vmatpush.msra.mxu0 %v1015
    %1039 = vmatpush.msra.mxu0 %v1014
    %1040 = vmatpush.msra.mxu0 %v1013
    %1041 = vmatpush.msra.mxu0 %v1012
    %1042 = vmatpush.msra.mxu0 %v1011
    %1043 = vmatmul.f32.gmra.mxu0 %v970
    %v1044 = vpop.f32.mrf.mxu0
    %v1045 = vadd.f32 0.0, %v1044
    %1046 = vmatmul.f32.gmra.mxu0 %v971
    %v1047 = vpop.f32.mrf.mxu0
    %v1048 = vadd.f32 0.0, %v1047
    %1049 = vdwg.mxu0
    %v1050 = vld [vmem:[#allocation11 + $0x140] sm:$0xff]
    %v1051 = vld [vmem:[#allocation11 + $0x148] sm:$0xff]
    %v1052 = vld [vmem:[#allocation11 + $0x150] sm:$0xff]
    %v1053 = vld [vmem:[#allocation11 + $0x158] sm:$0xff]
    %v1054 = vld [vmem:[#allocation11 + $0x160] sm:$0xff]
    %v1055 = vld [vmem:[#allocation11 + $0x168] sm:$0xff]
    %v1056 = vld [vmem:[#allocation11 + $0x170] sm:$0xff]
    %v1057 = vld [vmem:[#allocation11 + $0x178] sm:$0xff]
    %v1058 = vld [vmem:[#allocation11 + $0x180] sm:$0xff]
    %v1059 = vld [vmem:[#allocation11 + $0x188] sm:$0xff]
    %v1060 = vld [vmem:[#allocation11 + $0x190] sm:$0xff]
    %v1061 = vld [vmem:[#allocation11 + $0x198] sm:$0xff]
    %v1062 = vld [vmem:[#allocation11 + $0x1a0] sm:$0xff]
    %v1063 = vld [vmem:[#allocation11 + $0x1a8] sm:$0xff]
    %v1064 = vld [vmem:[#allocation11 + $0x1b0] sm:$0xff]
    %v1065 = vld [vmem:[#allocation11 + $0x1b8] sm:$0xff]
    %1066 = vmatpush.msra.mxu0 %v1065
    %1067 = vmatpush.msra.mxu0 %v1064
    %1068 = vmatpush.msra.mxu0 %v1063
    %1069 = vmatpush.msra.mxu0 %v1062
    %1070 = vmatpush.msra.mxu0 %v1061
    %1071 = vmatpush.msra.mxu0 %v1060
    %1072 = vmatpush.msra.mxu0 %v1059
    %1073 = vmatpush.msra.mxu0 %v1058
    %1074 = vmatpush.msra.mxu0 %v1057
    %1075 = vmatpush.msra.mxu0 %v1056
    %1076 = vmatpush.msra.mxu0 %v1055
    %1077 = vmatpush.msra.mxu0 %v1054
    %1078 = vmatpush.msra.mxu0 %v1053
    %1079 = vmatpush.msra.mxu0 %v1052
    %1080 = vmatpush.msra.mxu0 %v1051
    %1081 = vmatpush.msra.mxu0 %v1050
    %1082 = vmatmul.f32.gmra.mxu0 %v970
    %v1083 = vpop.f32.mrf.mxu0
    %v1084 = vadd.f32 0.0, %v1083
    %1085 = vmatmul.f32.gmra.mxu0 %v971
    %v1086 = vpop.f32.mrf.mxu0
    %v1087 = vadd.f32 0.0, %v1086
    %1088 = vdwg.mxu0
    %v1089 = vld [vmem:[#allocation11 + $0x208] sm:$0xff]
    %v1090 = vld [vmem:[#allocation11 + $0x210] sm:$0xff]
    %v1091 = vld [vmem:[#allocation11 + $0x218] sm:$0xff]
    %v1092 = vld [vmem:[#allocation11 + $0x220] sm:$0xff]
    %v1093 = vld [vmem:[#allocation11 + $0x228] sm:$0xff]
    %v1094 = vld [vmem:[#allocation11 + $0x230] sm:$0xff]
    %v1095 = vld [vmem:[#allocation11 + $0x238] sm:$0xff]
    %v1096 = vld [vmem:[#allocation11 + $0x240] sm:$0xff]
    %v1097 = vld [vmem:[#allocation11 + $0x248] sm:$0xff]
    %v1098 = vld [vmem:[#allocation11 + $0x250] sm:$0xff]
    %v1099 = vld [vmem:[#allocation11 + $0x258] sm:$0xff]
    %v1100 = vld [vmem:[#allocation11 + $0x260] sm:$0xff]
    %v1102 = vsel %vm439, %v1089, 0
    %v1105 = vsel %vm439, %v1090, 0
    %v1108 = vsel %vm439, %v1091, 0
    %v1111 = vsel %vm439, %v1092, 0
    %v1114 = vsel %vm439, %v1093, 0
    %v1117 = vsel %vm439, %v1094, 0
    %v1120 = vsel %vm458, %v1048, 0
    %1122 = vmatpush.msra.mxu0 0.0
    %1123 = vmatpush.msra.mxu0 0.0
    %1124 = vmatpush.msra.mxu0 0.0
    %1125 = vmatpush.msra.mxu0 0.0
    %1126 = vmatpush.msra.mxu0 0.0
    %1127 = vmatpush.msra.mxu0 0.0
    %1128 = vmatpush.msra.mxu0 0.0
    %1129 = vmatpush.msra.mxu0 0.0
    %1130 = vmatpush.msra.mxu0 0.0
    %1131 = vmatpush.msra.mxu0 0.0
    %1132 = vmatpush.msra.mxu0 0.0
    %1133 = vmatpush.msra.mxu0 0.0
    %1134 = vmatpush.msra.mxu0 0.0
    %1135 = vmatpush.msra.mxu0 0.0
    %1136 = vmatpush.msra.mxu0 %v1120
    %1137 = vmatpush.msra.mxu0 %v1045
    %1138 = vmatmul.f32.gmra.mxu0 %v1102
    %v1139 = vpop.f32.mrf.mxu0
    %v1140 = vadd.f32 0.0, %v1139
    %1141 = vmatmul.f32.gmra.mxu0 %v1105
    %v1142 = vpop.f32.mrf.mxu0
    %v1143 = vadd.f32 0.0, %v1142
    %1144 = vmatmul.f32.gmra.mxu0 %v1108
    %v1145 = vpop.f32.mrf.mxu0
    %v1146 = vadd.f32 0.0, %v1145
    %1147 = vmatmul.f32.gmra.mxu0 %v1111
    %v1148 = vpop.f32.mrf.mxu0
    %v1149 = vadd.f32 0.0, %v1148
    %1150 = vmatmul.f32.gmra.mxu0 %v1114
    %v1151 = vpop.f32.mrf.mxu0
    %v1152 = vadd.f32 0.0, %v1151
    %1153 = vmatmul.f32.gmra.mxu0 %v1117
    %v1154 = vpop.f32.mrf.mxu0
    %v1155 = vadd.f32 0.0, %v1154
    %1156 = vdwg.mxu0
    %v1157 = vmul.f32 %v1140, %v1095
    %v1158 = vmul.f32 %v1143, %v1096
    %v1159 = vmul.f32 %v1146, %v1097
    %v1160 = vmul.f32 %v1149, %v1098
    %v1161 = vmul.f32 %v1152, %v1099
    %v1162 = vmul.f32 %v1155, %v1100
    %v1164 = vsel %vm458, %v1087, 0
    %1166 = vmatpush.msra.mxu0 0.0
    %1167 = vmatpush.msra.mxu0 0.0
    %1168 = vmatpush.msra.mxu0 0.0
    %1169 = vmatpush.msra.mxu0 0.0
    %1170 = vmatpush.msra.mxu0 0.0
    %1171 = vmatpush.msra.mxu0 0.0
    %1172 = vmatpush.msra.mxu0 0.0
    %1173 = vmatpush.msra.mxu0 0.0
    %1174 = vmatpush.msra.mxu0 0.0
    %1175 = vmatpush.msra.mxu0 0.0
    %1176 = vmatpush.msra.mxu0 0.0
    %1177 = vmatpush.msra.mxu0 0.0
    %1178 = vmatpush.msra.mxu0 0.0
    %1179 = vmatpush.msra.mxu0 0.0
    %1180 = vmatpush.msra.mxu0 %v1164
    %1181 = vmatpush.msra.mxu0 %v1084
    %1182 = vmatmul.f32.gmra.mxu0 %v1102
    %v1183 = vpop.f32.mrf.mxu0
    %v1184 = vadd.f32 0.0, %v1183
    %1185 = vmatmul.f32.gmra.mxu0 %v1105
    %v1186 = vpop.f32.mrf.mxu0
    %v1187 = vadd.f32 0.0, %v1186
    %1188 = vmatmul.f32.gmra.mxu0 %v1108
    %v1189 = vpop.f32.mrf.mxu0
    %v1190 = vadd.f32 0.0, %v1189
    %1191 = vmatmul.f32.gmra.mxu0 %v1111
    %v1192 = vpop.f32.mrf.mxu0
    %v1193 = vadd.f32 0.0, %v1192
    %1194 = vmatmul.f32.gmra.mxu0 %v1114
    %v1195 = vpop.f32.mrf.mxu0
    %v1196 = vadd.f32 0.0, %v1195
    %1197 = vmatmul.f32.gmra.mxu0 %v1117
    %v1198 = vpop.f32.mrf.mxu0
    %v1199 = vadd.f32 0.0, %v1198
    %1200 = vdwg.mxu0
    %v1201 = vmul.f32 %v1184, %v1095
    %v1202 = vmul.f32 %v1187, %v1096
    %v1203 = vmul.f32 %v1190, %v1097
    %v1204 = vmul.f32 %v1193, %v1098
    %v1205 = vmul.f32 %v1196, %v1099
    %v1206 = vmul.f32 %v1199, %v1100
    %v1208 = vsel %vm132, %v1009, 0
    %v1211 = vsel %vm132, %v1010, 0
    %v1214 = vsel %vm132, %v1157, 0
    %v1217 = vsel %vm132, %v1158, 0
    %v1220 = vsel %vm132, %v1159, 0
    %v1223 = vsel %vm132, %v1160, 0
    %v1226 = vsel %vm132, %v1161, 0
    %v1229 = vsel %vm132, %v1162, 0
    %1231 = vmatpush.xpose.msra.mxu0 0.0
    %1232 = vmatpush.xpose.msra.mxu0 0.0
    %1233 = vmatpush.xpose.msra.mxu0 0.0
    %1234 = vmatpush.xpose.msra.mxu0 0.0
    %1235 = vmatpush.xpose.msra.mxu0 0.0
    %1236 = vmatpush.xpose.msra.mxu0 0.0
    %1237 = vmatpush.xpose.msra.mxu0 0.0
    %1238 = vmatpush.xpose.msra.mxu0 0.0
    %1239 = vmatpush.xpose.msra.mxu0 0.0
    %1240 = vmatpush.xpose.msra.mxu0 0.0
    %1241 = vmatpush.xpose.msra.mxu0 %v1229
    %1242 = vmatpush.xpose.msra.mxu0 %v1226
    %1243 = vmatpush.xpose.msra.mxu0 %v1223
    %1244 = vmatpush.xpose.msra.mxu0 %v1220
    %1245 = vmatpush.xpose.msra.mxu0 %v1217
    %1246 = vmatpush.xpose.msra.mxu0 %v1214
    %1247 = vmatmul.f32.gmra.mxu0 %v1208
    %v1248 = vpop.f32.mrf.mxu0
    %v1249 = vadd.f32 %v836, %v1248
    %1250 = vmatmul.f32.gmra.mxu0 %v1211
    %v1251 = vpop.f32.mrf.mxu0
    %v1252 = vadd.f32 %v837, %v1251
    %1253 = vdwg.mxu0
    %vm1254 = vcmp.lt.f32.partialorder %v836, 0.0
    %vm1255 = vcmp.lt.f32.partialorder %v837, 0.0
    %v1256 = vsel %vm1254, -inf, %v1249
    %v1257 = vsel %vm1255, -inf, %v1252
    %v1258 = vld [vmem:[#allocation11 + $0x268] sm:$0xf]
    %vm1259 = vcmp.gt.f32.partialorder %v1258, 0.0
    %v1260 = vsel %vm1259, 1, 0
    %v1261 = vperm.slane %v1260, 0
    %vm1262 = vcmp.eq.s32.totalorder %v1261, 1
    %v1263 = vsel %vm1262, %v1249, -inf
    %v1264 = vsel %vm1262, %v1252, -inf
    %v1265 = vsel %vm605, %v1263, -inf
    %1266 = vmax.xlane.f32.xlu0 %v1265
    %v1267 = vpop.xlane.xlu0 %1266
    %v1268 = vsel %vm609, %v1264, -inf
    %1269 = vmax.xlane.f32.xlu0 %v1268
    %v1270 = vpop.xlane.xlu0 %1269
    %v1271 = vperm.slane %v1258, 0
    %v1272 = vmul.f32 %v1267, %v1271
    %v1273 = vmul.f32 %v1270, %v1271
    %v1274 = vadd.f32 %v1272, 0.0
    %v1275 = vadd.f32 %v1273, 0.0
    %v1276 = vperm.slane %v1260, 1
    %vm1277 = vcmp.eq.s32.totalorder %v1276, 1
    %v1278 = vsel %vm1277, %v1249, -inf
    %v1279 = vsel %vm1277, %v1252, -inf
    %v1280 = vsel %vm605, %v1278, -inf
    %1281 = vmax.xlane.f32.xlu0 %v1280
    %v1282 = vpop.xlane.xlu0 %1281
    %v1283 = vsel %vm609, %v1279, -inf
    %1284 = vmax.xlane.f32.xlu0 %v1283
    %v1285 = vpop.xlane.xlu0 %1284
    %v1286 = vperm.slane %v1258, 1
    %v1287 = vmul.f32 %v1282, %v1286
    %v1288 = vmul.f32 %v1285, %v1286
    %v1289 = vadd.f32 %v1274, %v1287
    %v1290 = vadd.f32 %v1275, %v1288
    %v1291 = vperm.slane %v1260, 2
    %vm1292 = vcmp.eq.s32.totalorder %v1291, 1
    %v1293 = vsel %vm1292, %v1249, -inf
    %v1294 = vsel %vm1292, %v1252, -inf
    %v1295 = vsel %vm605, %v1293, -inf
    %1296 = vmax.xlane.f32.xlu0 %v1295
    %v1297 = vpop.xlane.xlu0 %1296
    %v1298 = vsel %vm609, %v1294, -inf
    %1299 = vmax.xlane.f32.xlu0 %v1298
    %v1300 = vpop.xlane.xlu0 %1299
    %v1301 = vperm.slane %v1258, 2
    %v1302 = vmul.f32 %v1297, %v1301
    %v1303 = vmul.f32 %v1300, %v1301
    %v1304 = vadd.f32 %v1289, %v1302
    %v1305 = vadd.f32 %v1290, %v1303
    %v1306 = vperm.slane %v1260, 3
    %vm1307 = vcmp.eq.s32.totalorder %v1306, 1
    %v1308 = vsel %vm1307, %v1249, -inf
    %v1309 = vsel %vm1307, %v1252, -inf
    %v1310 = vsel %vm605, %v1308, -inf
    %1311 = vmax.xlane.f32.xlu0 %v1310
    %v1312 = vpop.xlane.xlu0 %1311
    %v1313 = vsel %vm609, %v1309, -inf
    %1314 = vmax.xlane.f32.xlu0 %v1313
    %v1315 = vpop.xlane.xlu0 %1314
    %v1316 = vperm.slane %v1258, 3
    %v1317 = vmul.f32 %v1312, %v1316
    %v1318 = vmul.f32 %v1315, %v1316
    %v1319 = vadd.f32 %v1304, %v1317
    %v1320 = vadd.f32 %v1305, %v1318
    %v1321 = vsub.f32 %v1249, %v1319
    %v1322 = vsub.f32 %v1252, %v1320
    %v1323 = vmul.f32 %v1321, 1.442695
    %v1324 = vpow.pop %v1323
    %v1325 = vmul.f32 %v1322, 1.442695
    %v1326 = vpow.pop %v1325
    %v1327 = vmul.f32 %v1324, %v1271
    %v1328 = vmul.f32 %v1326, %v1271
    %v1329 = vsel %vm605, %v1327, 0.0
    %1330 = vadd.xlane.f32.xlu0 %v1329
    %v1331 = vpop.xlane.xlu0 %1330
    %v1332 = vsel %vm609, %v1328, 0.0
    %1333 = vadd.xlane.f32.xlu0 %v1332
    %v1334 = vpop.xlane.xlu0 %1333
    %v1335 = vrcp.pop %v1331
    %v1336 = vrcp.pop %v1334
    %v1337 = vmul.f32 %v1335, %v1271
    %v1338 = vmul.f32 %v1336, %v1271
    %v1339 = vadd.f32 %v1337, 0.0
    %v1340 = vadd.f32 %v1338, 0.0
    %v1341 = vmul.f32 %v1324, %v1286
    %v1342 = vmul.f32 %v1326, %v1286
    %v1343 = vsel %vm605, %v1341, 0.0
    %1344 = vadd.xlane.f32.xlu0 %v1343
    %v1345 = vpop.xlane.xlu0 %1344
    %v1346 = vsel %vm609, %v1342, 0.0
    %1347 = vadd.xlane.f32.xlu0 %v1346
    %v1348 = vpop.xlane.xlu0 %1347
    %v1349 = vrcp.pop %v1345
    %v1350 = vrcp.pop %v1348
    %v1351 = vmul.f32 %v1349, %v1286
    %v1352 = vmul.f32 %v1350, %v1286
    %v1353 = vadd.f32 %v1339, %v1351
    %v1354 = vadd.f32 %v1340, %v1352
    %v1355 = vmul.f32 %v1324, %v1301
    %v1356 = vmul.f32 %v1326, %v1301
    %v1357 = vsel %vm605, %v1355, 0.0
    %1358 = vadd.xlane.f32.xlu0 %v1357
    %v1359 = vpop.xlane.xlu0 %1358
    %v1360 = vsel %vm609, %v1356, 0.0
    %1361 = vadd.xlane.f32.xlu0 %v1360
    %v1362 = vpop.xlane.xlu0 %1361
    %v1363 = vrcp.pop %v1359
    %v1364 = vrcp.pop %v1362
    %v1365 = vmul.f32 %v1363, %v1301
    %v1366 = vmul.f32 %v1364, %v1301
    %v1367 = vadd.f32 %v1353, %v1365
    %v1368 = vadd.f32 %v1354, %v1366
    %v1369 = vmul.f32 %v1324, %v1316
    %v1370 = vmul.f32 %v1326, %v1316
    %v1371 = vsel %vm605, %v1369, 0.0
    %1372 = vadd.xlane.f32.xlu0 %v1371
    %v1373 = vpop.xlane.xlu0 %1372
    %v1374 = vsel %vm609, %v1370, 0.0
    %1375 = vadd.xlane.f32.xlu0 %v1374
    %v1376 = vpop.xlane.xlu0 %1375
    %v1377 = vrcp.pop %v1373
    %v1378 = vrcp.pop %v1376
    %v1379 = vmul.f32 %v1377, %v1316
    %v1380 = vmul.f32 %v1378, %v1316
    %v1381 = vadd.f32 %v1367, %v1379
    %v1382 = vadd.f32 %v1368, %v1380
    %v1383 = vmul.f32 %v1324, %v1381
    %v1384 = vmul.f32 %v1326, %v1382
    %v1386 = vsel %vm605, %v1383, 0
    %v1389 = vsel %vm605, %v1384, 0
    %1391 = vmatpush.msra.mxu0 0.0
    %1392 = vmatpush.msra.mxu0 0.0
    %1393 = vmatpush.msra.mxu0 0.0
    %1394 = vmatpush.msra.mxu0 0.0
    %1395 = vmatpush.msra.mxu0 0.0
    %1396 = vmatpush.msra.mxu0 0.0
    %1397 = vmatpush.msra.mxu0 0.0
    %1398 = vmatpush.msra.mxu0 0.0
    %1399 = vmatpush.msra.mxu0 0.0
    %1400 = vmatpush.msra.mxu0 0.0
    %1401 = vmatpush.msra.mxu0 %v1206
    %1402 = vmatpush.msra.mxu0 %v1205
    %1403 = vmatpush.msra.mxu0 %v1204
    %1404 = vmatpush.msra.mxu0 %v1203
    %1405 = vmatpush.msra.mxu0 %v1202
    %1406 = vmatpush.msra.mxu0 %v1201
    %1407 = vmatmul.f32.gmra.mxu0 %v1386
    %v1408 = vpop.f32.mrf.mxu0
    %v1409 = vadd.f32 0.0, %v1408
    %1410 = vmatmul.f32.gmra.mxu0 %v1389
    %v1411 = vpop.f32.mrf.mxu0
    %v1412 = vadd.f32 0.0, %v1411
    %1413 = vdwg.mxu0
    %v1414 = vsub.f32 0.0, %v1409
    %v1415 = vsub.f32 0.0, %v1412
    %v1416 = vmul.f32 %v1414, 1.442695
    %v1417 = vpow.pop %v1416
    %v1418 = vmul.f32 %v1415, 1.442695
    %v1419 = vpow.pop %v1418
    %v1420 = vadd.f32 %v1417, 1.0
    %v1421 = vadd.f32 %v1419, 1.0
    %v1422 = vrcp.pop %v1420
    %v1423 = vrcp.pop %v1421
    %v1424 = vmul.f32 %v1409, %v1422
    %v1425 = vmul.f32 %v1412, %v1423
    %v1426 = vld [vmem:[#allocation11 + $0x1c0] sm:$0xff]
    %v1427 = vld [vmem:[#allocation11 + $0x1c8] sm:$0xff]
    %v1428 = vld [vmem:[#allocation11 + $0x1d0] sm:$0xff]
    %v1429 = vld [vmem:[#allocation11 + $0x1d8] sm:$0xff]
    %v1430 = vld [vmem:[#allocation11 + $0x1e0] sm:$0xff]
    %v1431 = vld [vmem:[#allocation11 + $0x1e8] sm:$0xff]
    %v1432 = vld [vmem:[#allocation11 + $0x1f0] sm:$0xff]
    %v1433 = vld [vmem:[#allocation11 + $0x1f8] sm:$0xff]
    %v1435 = vsel %vm132, %v1424, 0
    %v1438 = vsel %vm132, %v1425, 0
    %1440 = vmatpush.msra.mxu0 0.0
    %1441 = vmatpush.msra.mxu0 0.0
    %1442 = vmatpush.msra.mxu0 0.0
    %1443 = vmatpush.msra.mxu0 0.0
    %1444 = vmatpush.msra.mxu0 0.0
    %1445 = vmatpush.msra.mxu0 0.0
    %1446 = vmatpush.msra.mxu0 0.0
    %1447 = vmatpush.msra.mxu0 0.0
    %1448 = vmatpush.msra.mxu0 0.0
    %1449 = vmatpush.msra.mxu0 0.0
    %1450 = vmatpush.msra.mxu0 0.0
    %1451 = vmatpush.msra.mxu0 0.0
    %1452 = vmatpush.msra.mxu0 %v1433
    %1453 = vmatpush.msra.mxu0 %v1432
    %1454 = vmatpush.msra.mxu0 %v1431
    %1455 = vmatpush.msra.mxu0 %v1430
    %1456 = vmatmul.f32.gmra.mxu0 %v1435
    %v1457 = vpop.f32.mrf.mxu0
    %v1458 = vadd.f32 0.0, %v1457
    %1459 = vmatmul.f32.gmra.mxu0 %v1438
    %v1460 = vpop.f32.mrf.mxu0
    %v1461 = vadd.f32 0.0, %v1460
    %1462 = vdwg.mxu0
    %1463 = vmatpush.msra.mxu0 0.0
    %1464 = vmatpush.msra.mxu0 0.0
    %1465 = vmatpush.msra.mxu0 0.0
    %1466 = vmatpush.msra.mxu0 0.0
    %1467 = vmatpush.msra.mxu0 0.0
    %1468 = vmatpush.msra.mxu0 0.0
    %1469 = vmatpush.msra.mxu0 0.0
    %1470 = vmatpush.msra.mxu0 0.0
    %1471 = vmatpush.msra.mxu0 0.0
    %1472 = vmatpush.msra.mxu0 0.0
    %1473 = vmatpush.msra.mxu0 0.0
    %1474 = vmatpush.msra.mxu0 0.0
    %1475 = vmatpush.msra.mxu0 %v1429
    %1476 = vmatpush.msra.mxu0 %v1428
    %1477 = vmatpush.msra.mxu0 %v1427
    %1478 = vmatpush.msra.mxu0 %v1426
    %1479 = vmatmul.f32.gmra.mxu0 %v903
    %v1480 = vpop.f32.mrf.mxu0
    %v1481 = vadd.f32 %v1458, %v1480
    %1482 = vmatmul.f32.gmra.mxu0 %v906
    %v1483 = vpop.f32.mrf.mxu0
    %v1484 = vadd.f32 %v1461, %v1483
    %1485 = vdwg.mxu0
    %v1486 = vld [vmem:[#allocation11 + $0x200] sm:$0x1]
    %v1487 = vperm.slane %v1486, 0
    %v1488 = vadd.f32 %v1481, %v1487
    %v1489 = vadd.f32 %v1484, %v1487
    %1490 = vst.msk [vmem:[#allocation14] sm:$0xff] %vm132, %v1488
    %1491 = vst.msk [vmem:[#allocation14 + $0x8] sm:$0xf] %vm136, %v1489
    %1492 = vst.msk [vmem:[#allocation17] sm:$0xff] %vm605, %v1256
    %1493 = vst.msk [vmem:[#allocation17 + $0x8] sm:$0xf] %vm609, %v1257
    // Predicated region
    $region50: #{tpu_custom_call.1} parent=1 // pred_check
      _
    $region51: #{tpu_custom_call.1} parent=1 // pred_check_branch
      %1495 = sbr.rel (0) target = $region53
    $region52: #{tpu_custom_call.1} parent=1 // pred_region
      %1497 = vsyncadd [#allocation4], 0
      %s1498 = sshll.u32 [#allocation13], 4
      %s1499 = int_to_ptr.vmem [resolvable:$true] %s1498
      %s1500 = sshll.u32 %s6, 4
      %s1501 = int_to_ptr.hbm [resolvable:$true] %s1500
      %1506 = dma.vmem_to_hbm [thread:$0]  %s1499, 256, %s1501, [#allocation4], 128, 128, 8
    $region53: #{tpu_custom_call.1} parent=1 // pred_fallthru
      _
    // Predicated region
    $region54: #{tpu_custom_call.1} parent=1 // pred_check
      _
    $region55: #{tpu_custom_call.1} parent=1 // pred_check_branch
      %1508 = sbr.rel (0) target = $region57
    $region56: #{tpu_custom_call.1} parent=1 // pred_region
      %1510 = vsyncadd [#allocation15], 0
      %s1511 = sshll.u32 [#allocation14], 4
      %s1512 = int_to_ptr.vmem [resolvable:$true] %s1511
      %s1513 = sshll.u32 %s7, 4
      %s1514 = int_to_ptr.hbm [resolvable:$true] %s1513
      %1519 = dma.vmem_to_hbm [thread:$0]  %s1512, 256, %s1514, [#allocation15], 128, 128, 8
    $region57: #{tpu_custom_call.1} parent=1 // pred_fallthru
      _
    // Predicated region
    $region58: #{tpu_custom_call.1} parent=1 // pred_check
      _
    $region59: #{tpu_custom_call.1} parent=1 // pred_check_branch
      %1521 = sbr.rel (0) target = $region61
    $region60: #{tpu_custom_call.1} parent=1 // pred_region
      %1523 = vsyncadd [#allocation15], 0
      %s1524 = sshll.u32 [#allocation16], 4
      %s1525 = int_to_ptr.vmem [resolvable:$true] %s1524
      %s1526 = sshll.u32 %s8, 4
      %s1527 = int_to_ptr.hbm [resolvable:$true] %s1526
      %1532 = dma.vmem_to_hbm [thread:$0]  %s1525, 256, %s1527, [#allocation15], 128, 128, 8
    $region61: #{tpu_custom_call.1} parent=1 // pred_fallthru
      _
    // Predicated region
    $region62: #{tpu_custom_call.1} parent=1 // pred_check
      _
    $region63: #{tpu_custom_call.1} parent=1 // pred_check_branch
      %1534 = sbr.rel (0) target = $region65
    $region64: #{tpu_custom_call.1} parent=1 // pred_region
      %1536 = vsyncadd [#allocation18], 0
      %s1537 = sshll.u32 [#allocation17], 4
      %s1538 = int_to_ptr.vmem [resolvable:$true] %s1537
      %s1539 = sshll.u32 %s9, 4
      %s1540 = int_to_ptr.hbm [resolvable:$true] %s1539
      %1545 = dma.vmem_to_hbm [thread:$0]  %s1538, 256, %s1540, [#allocation18], 128, 128, 8
    $region65: #{tpu_custom_call.1} parent=1 // pred_fallthru
      _
    // Predicated region
    $region66: #{tpu_custom_call.1} parent=1 // pred_check
      _
    $region67: #{tpu_custom_call.1} parent=1 // pred_check_branch
      %1547 = sbr.rel (0) target = $region69
    $region68: #{tpu_custom_call.1} parent=1 // pred_region
      %1549 = dma.done [#allocation4], 256
    $region69: #{tpu_custom_call.1} parent=1 // pred_fallthru
      _
    // Predicated region
    $region70: #{tpu_custom_call.1} parent=1 // pred_check
      _
    $region71: #{tpu_custom_call.1} parent=1 // pred_check_branch
      %1551 = sbr.rel (0) target = $region73
    $region72: #{tpu_custom_call.1} parent=1 // pred_region
      %1553 = dma.done [#allocation15], 256
    $region73: #{tpu_custom_call.1} parent=1 // pred_fallthru
      _
    // Predicated region
    $region74: #{tpu_custom_call.1} parent=1 // pred_check
      _
    $region75: #{tpu_custom_call.1} parent=1 // pred_check_branch
      %1555 = sbr.rel (0) target = $region77
    $region76: #{tpu_custom_call.1} parent=1 // pred_region
      %1557 = dma.done [#allocation15], 256
    $region77: #{tpu_custom_call.1} parent=1 // pred_fallthru
      _
    // Predicated region
    $region78: #{tpu_custom_call.1} parent=1 // pred_check
      _
    $region79: #{tpu_custom_call.1} parent=1 // pred_check_branch
      %1559 = sbr.rel (0) target = $region81
    $region80: #{tpu_custom_call.1} parent=1 // pred_region
      %1561 = dma.done [#allocation18], 256
    $region81: #{tpu_custom_call.1} parent=1 // pred_fallthru
      _
    %1562 = vsyncpa [#allocation3], 1
    %1563 = vsyncpa [#allocation6], 1
    %1564 = vsyncpa [#allocation9], 1
    %1565 = vsyncpa [#allocation12], 1
    %1566 = vsyncpa [#allocation4], 1
    %1567 = vsyncpa [#allocation15], 1
    %1568 = vsyncpa [#allocation18], 1

</llo_original>
